<compile_context>
chip_gen: v6e
topology: v6e:2x2x1
jax: 0.10.0
libtpu: 0.0.40
codegen_flags: <defaults>
</compile_context>

<pallas_src>
import functools

import jax
import jax.numpy as jnp
from jax.experimental import pallas as pl
from jax.experimental.pallas import tpu as pltpu


# ---------------------------------------------------------------------------
# Kernel
# ---------------------------------------------------------------------------
def _reward_mlp_kernel(s_ref, ns_ref, t_ref,
                       w0s_ref, w0ns_ref, w0t_ref, b0_ref,
                       w1_ref, b1_ref, w2_ref, b2_ref,
                       o_ref):
    """Fused 2-hidden-layer reward MLP over one batch tile.

    Layer 0 fuses the feature concat:  concat([s, ns, t]) @ W0
        == s @ W0[:S] + ns @ W0[S:2S] + t * W0[2S] .
    bf16 (compute dtype) on the MXU with f32 accumulation; biases and the
    rank-1 terminal update stay in f32 on the VPU.
    """
    cdt = w1_ref.dtype  # MXU compute dtype (bf16 by default)

    # ---- hidden layer 0 (two MXU matmuls + rank-1 terminal update) ---------
    h = jnp.dot(s_ref[...].astype(cdt), w0s_ref[...],
                preferred_element_type=jnp.float32)
    h = h + jnp.dot(ns_ref[...].astype(cdt), w0ns_ref[...],
                    preferred_element_type=jnp.float32)
    h = h + t_ref[...].astype(jnp.float32) * w0t_ref[...]
    # Cast to the compute dtype exactly once, at the ReLU.
    h0 = jnp.maximum(h + b0_ref[...], 0.0).astype(cdt)

    # ---- hidden layer 1 -----------------------------------------------------
    h = jnp.dot(h0, w1_ref[...], preferred_element_type=jnp.float32)
    h1 = jnp.maximum(h + b1_ref[...], 0.0).astype(cdt)

    # ---- scalar head, output_activation=None (identity) --------------------
    r = jnp.dot(h1, w2_ref[...], preferred_element_type=jnp.float32)
    o_ref[...] = (r + b2_ref[...]).astype(o_ref.dtype)


# ---------------------------------------------------------------------------
# Param preparation (done ONCE, outside jit)
# ---------------------------------------------------------------------------
def prepare_reward_params(params, state_dim, compute_dtype=jnp.bfloat16):
    """Split W0 row-wise (state / next_state / terminal) and cast weights."""
    S = state_dim
    w0 = jnp.asarray(params["w0"])
    H = w0.shape[1]
    assert w0.shape[0] == 2 * S + 1, "w0 must have 2*S+1 input rows"
    return dict(
        w0s=w0[:S].astype(compute_dtype),
        w0ns=w0[S:2 * S].astype(compute_dtype),
        w0t=w0[2 * S:2 * S + 1].astype(jnp.float32),                 # [1, H]
        b0=jnp.asarray(params["b0"]).reshape(1, H).astype(jnp.float32),
        w1=jnp.asarray(params["w1"]).astype(compute_dtype),          # [H, H]
        b1=jnp.asarray(params["b1"]).reshape(1, H).astype(jnp.float32),
        w2=jnp.asarray(params["w2"]).astype(compute_dtype),          # [H, 1]
        b2=jnp.asarray(params["b2"]).reshape(1, 1).astype(jnp.float32),
    )


# ---------------------------------------------------------------------------
# Generation-aware batch-tile selection
# ---------------------------------------------------------------------------
def _round_up8(x):
    return ((x + 7) // 8) * 8


def _choose_block_b(B):
    """Pick a batch tile: big tiles to amortize per-grid-step overhead,
    a v5e VMEM-friendly cap, and >= 2 steps on v7x so both TensorCores run."""
    try:
        kind = jax.devices()[0].device_kind.lower()
    except Exception:  # pragma: no cover - defensive default
        kind = ""
    is_v5e = ("v5e" in kind) or ("v5 lite" in kind) or ("v5lite" in kind)
    is_v7 = ("v7" in kind) or ("7x" in kind)
    cap = 4096 if is_v5e else 8192   # v5e scoped-VMEM default is 16 MiB

    if is_v7 and B > 8:
        # At least 2 grid steps so megacore shards the "parallel" batch axis.
        return min(_round_up8(pl.cdiv(B, 2)), cap)
    if B <= cap:
        return B                      # single step; full-dim block is legal
    return cap


# ---------------------------------------------------------------------------
# Forward
# ---------------------------------------------------------------------------
@functools.partial(jax.jit, static_argnames=("block_b",))
def _reward_forward_impl(state, next_state, terminal, prep, *, block_b):
    B, S = state.shape
    H = prep["w1"].shape[0]
    n_blocks = pl.cdiv(B, block_b)    # ragged last block handled by Pallas

    def act_spec(d):
        return pl.BlockSpec((block_b, d), lambda i: (i, 0))

    def full_spec(shape):
        return pl.BlockSpec(shape, lambda i: (0, 0))

    return pl.pallas_call(
        _reward_mlp_kernel,
        out_shape=jax.ShapeDtypeStruct((B, 1), jnp.float32),
        grid_spec=pltpu.PrefetchScalarGridSpec(
            num_scalar_prefetch=0,
            grid=(n_blocks,),
            in_specs=[
                # Activations: tiled over the batch axis.
                act_spec(S),            # state
                act_spec(S),            # next_state
                act_spec(1),            # terminal
                # Weights / biases: fully VMEM-resident for every grid step.
                full_spec((S, H)),      # w0s
                full_spec((S, H)),      # w0ns
                full_spec((1, H)),      # w0t
                full_spec((1, H)),      # b0
                full_spec((H, H)),      # w1
                full_spec((1, H)),      # b1
                full_spec((H, 1)),      # w2
                full_spec((1, 1)),      # b2
            ],
            out_specs=pl.BlockSpec((block_b, 1), lambda i: (i, 0)),
        ),
        compiler_params=pltpu.CompilerParams(
            dimension_semantics=("parallel",)),
    )(state, next_state, terminal,
      prep["w0s"], prep["w0ns"], prep["w0t"], prep["b0"],
      prep["w1"], prep["b1"], prep["w2"], prep["b2"])


def reward_forward(state, next_state, terminal, prep_params, *, block_b=None):
    """Computes r(state, next_state, terminal) with a Pallas TPU kernel.

    state:       [B, S]   (bf16 recommended; f32 accepted)
    next_state:  [B, S]
    terminal:    [B, 1]
    prep_params: output of prepare_reward_params (weights pre-split & cast)
    returns:     [B, 1] float32 reward prediction
    """
    B, S = state.shape
    assert next_state.shape == (B, S) and terminal.shape == (B, 1)
    if block_b is None:
        block_b = _choose_block_b(B)
    # Block must be a multiple of 8 rows unless it covers the whole batch.
    assert block_b == B or block_b % 8 == 0, "block_b must be a multiple of 8"
    return _reward_forward_impl(state, next_state, terminal, prep_params,
                                block_b=block_b)


# ---------------------------------------------------------------------------
# Init + references (for correctness checks)
# ---------------------------------------------------------------------------
def init_reward_params(key, state_dim, hidden_dim=128):
    """Deterministic nn.Linear-style init (uniform +/- 1/sqrt(fan_in))."""
    in_dim = 2 * state_dim + 1  # [state, next_state, terminal]
    dims = [(in_dim, hidden_dim), (hidden_dim, hidden_dim), (hidden_dim, 1)]
    params = {}
    for li, (fi, fo) in enumerate(dims):
        key, kw, kb = jax.random.split(key, 3)
        bound = 1.0 / jnp.sqrt(jnp.float32(fi))
        params[f"w{li}"] = jax.random.uniform(
            kw, (fi, fo), jnp.float32, -bound, bound)
        params[f"b{li}"] = jax.random.uniform(
            kb, (1, fo), jnp.float32, -bound, bound)
    return params


def _reference_forward_f32(state, next_state, terminal, params):
    """Pure float32 reference of the module semantics."""
    x = jnp.concatenate([state.astype(jnp.float32),
                         next_state.astype(jnp.float32),
                         terminal.astype(jnp.float32)], axis=-1)
    h = jnp.maximum(x @ params["w0"] + params["b0"], 0.0)
    h = jnp.maximum(h @ params["w1"] + params["b1"], 0.0)
    return h @ params["w2"] + params["b2"]


def _reference_forward_mixed(state, next_state, terminal, params,
                             compute_dtype=jnp.bfloat16):
    """Reference mirroring the kernel's bf16-compute / f32-accumulate path."""
    f32 = jnp.float32
    S = state.shape[1]
    H = params["w0"].shape[1]

    def cast(a):
        return a.astype(compute_dtype).astype(f32)

    w0 = params["w0"]
    h = (cast(state) @ cast(w0[:S])
         + cast(next_state) @ cast(w0[S:2 * S])
         + terminal.astype(f32) * w0[2 * S:2 * S + 1].astype(f32))
    h = jnp.maximum(h + params["b0"].reshape(1, H).astype(f32), 0.0)
    h = jnp.maximum(cast(h) @ cast(params["w1"])
                    + params["b1"].reshape(1, H).astype(f32), 0.0)
    return cast(h) @ cast(params["w2"]) + params["b2"].reshape(1, 1).astype(f32)


if __name__ == "__main__":
    key = jax.random.PRNGKey(0)
    k_params, k_s, k_ns, k_t = jax.random.split(key, 4)

    batch = 256
    state_dim = 16
    hidden_dim = 128   # lane-aligned; module default (256) works identically

    params = init_reward_params(k_params, state_dim, hidden_dim)
    prep = prepare_reward_params(params, state_dim)   # prepared once, outside jit

    # bf16 activations: halves the HBM read traffic of the dominant stream.
    state = jax.random.normal(k_s, (batch, state_dim), jnp.bfloat16)
    next_state = jax.random.normal(k_ns, (batch, state_dim), jnp.bfloat16)
    terminal = (jax.random.uniform(k_t, (batch, 1)) < 0.1).astype(jnp.bfloat16)

    # Default path (generation-aware block_b; whole batch on v5e/v6e,
    # >= 2 grid steps on v7x so both TensorCores run).
    reward = reward_forward(state, next_state, terminal, prep)
    jax.block_until_ready(reward)

    # Explicitly tiled path with a ragged last block (256 = 2*96 + 64):
    # exercises the no-pad partial-block masking (no wrapper jnp.pad).
    reward_tiled = reward_forward(state, next_state, terminal, prep, block_b=96)
    jax.block_until_ready(reward_tiled)

    ref_mixed = _reference_forward_mixed(state, next_state, terminal, params)
    ref_f32 = _reference_forward_f32(state, next_state, terminal, params)

    assert reward.shape == (batch, 1)
    assert jnp.allclose(reward, reward_tiled, atol=1e-5, rtol=1e-5)
    # Tight match against a reference mirroring the kernel's bf16 casts.
    assert jnp.allclose(reward, ref_mixed, atol=2e-3, rtol=2e-3)
    # Loose match against the exact f32 module semantics (bf16 precision).
    assert jnp.allclose(reward, ref_f32, atol=1e-1, rtol=1e-1)

    print("KERNEL_OK")
</pallas_src>

<mosaic_0001>
module attributes {stable_mosaic.version = 11 : i64} {
  func.func @_reward_mlp_kernel(%arg0: i32, %arg1: memref<256x16xbf16, #tpu.memory_space<vmem>>, %arg2: memref<256x16xbf16, #tpu.memory_space<vmem>>, %arg3: memref<256x1xbf16, #tpu.memory_space<vmem>>, %arg4: memref<16x128xbf16, #tpu.memory_space<vmem>>, %arg5: memref<16x128xbf16, #tpu.memory_space<vmem>>, %arg6: memref<1x128xf32, #tpu.memory_space<vmem>>, %arg7: memref<1x128xf32, #tpu.memory_space<vmem>>, %arg8: memref<128x128xbf16, #tpu.memory_space<vmem>>, %arg9: memref<1x128xf32, #tpu.memory_space<vmem>>, %arg10: memref<128x1xbf16, #tpu.memory_space<vmem>>, %arg11: memref<1x1xf32, #tpu.memory_space<vmem>>, %arg12: memref<256x1xf32, #tpu.memory_space<vmem>>) attributes {dimension_semantics = [#tpu.dimension_semantics<parallel>], iteration_bounds = array<i64: 1>, scalar_prefetch = 0 : i64, scratch_operands = 0 : i64, tpu.core_type = #tpu.core_type<tc>, window_params = [{transform_indices = @transform_0, window_bounds = array<i64: 256, 16>}, {transform_indices = @transform_1, window_bounds = array<i64: 256, 16>}, {transform_indices = @transform_2, window_bounds = array<i64: 256, 1>}, {pipeline_mode = #tpu.pipeline_mode<synchronous>, transform_indices = @transform_3, window_bounds = array<i64: 16, 128>}, {pipeline_mode = #tpu.pipeline_mode<synchronous>, transform_indices = @transform_4, window_bounds = array<i64: 16, 128>}, {pipeline_mode = #tpu.pipeline_mode<synchronous>, transform_indices = @transform_5, window_bounds = array<i64: 1, 128>}, {pipeline_mode = #tpu.pipeline_mode<synchronous>, transform_indices = @transform_6, window_bounds = array<i64: 1, 128>}, {pipeline_mode = #tpu.pipeline_mode<synchronous>, transform_indices = @transform_7, window_bounds = array<i64: 128, 128>}, {pipeline_mode = #tpu.pipeline_mode<synchronous>, transform_indices = @transform_8, window_bounds = array<i64: 1, 128>}, {pipeline_mode = #tpu.pipeline_mode<synchronous>, transform_indices = @transform_9, window_bounds = array<i64: 128, 1>}, {pipeline_mode = #tpu.pipeline_mode<synchronous>, transform_indices = @transform_10, window_bounds = array<i64: 1, 1>}, {transform_indices = @transform_11, window_bounds = array<i64: 256, 1>}]} {
    %c0 = arith.constant 0 : index
    %c0_0 = arith.constant 0 : index
    %0 = vector.load %arg1[%c0, %c0_0] : memref<256x16xbf16, #tpu.memory_space<vmem>>, vector<256x16xbf16>
    %c0_1 = arith.constant 0 : index
    %c0_2 = arith.constant 0 : index
    %1 = vector.load %arg4[%c0_1, %c0_2] : memref<16x128xbf16, #tpu.memory_space<vmem>>, vector<16x128xbf16>
    %cst = arith.constant dense<0.000000e+00> : vector<256x128xf32>
    %2 = tpu.matmul %0, %1, %cst {dimension_numbers = #tpu.dot_dimension_numbers<[1], [0], [0], [1], [0, 0, 1, 1], [], []>} : vector<256x16xbf16>, vector<16x128xbf16>, vector<256x128xf32> -> vector<256x128xf32>
    %c0_3 = arith.constant 0 : index
    %c0_4 = arith.constant 0 : index
    %3 = vector.load %arg2[%c0_3, %c0_4] : memref<256x16xbf16, #tpu.memory_space<vmem>>, vector<256x16xbf16>
    %c0_5 = arith.constant 0 : index
    %c0_6 = arith.constant 0 : index
    %4 = vector.load %arg5[%c0_5, %c0_6] : memref<16x128xbf16, #tpu.memory_space<vmem>>, vector<16x128xbf16>
    %cst_7 = arith.constant dense<0.000000e+00> : vector<256x128xf32>
    %5 = tpu.matmul %3, %4, %cst_7 {dimension_numbers = #tpu.dot_dimension_numbers<[1], [0], [0], [1], [0, 0, 1, 1], [], []>} : vector<256x16xbf16>, vector<16x128xbf16>, vector<256x128xf32> -> vector<256x128xf32>
    %6 = arith.addf %2, %5 : vector<256x128xf32>
    %c0_8 = arith.constant 0 : index
    %c0_9 = arith.constant 0 : index
    %7 = vector.load %arg3[%c0_8, %c0_9] : memref<256x1xbf16, #tpu.memory_space<vmem>>, vector<256x1xbf16>
    %8 = arith.extf %7 : vector<256x1xbf16> to vector<256x1xf32>
    %c0_10 = arith.constant 0 : index
    %c0_11 = arith.constant 0 : index
    %9 = vector.load %arg6[%c0_10, %c0_11] : memref<1x128xf32, #tpu.memory_space<vmem>>, vector<1x128xf32>
    %10 = vector.broadcast %8 : vector<256x1xf32> to vector<256x128xf32>
    %11 = vector.broadcast %9 : vector<1x128xf32> to vector<256x128xf32>
    %12 = arith.mulf %10, %11 : vector<256x128xf32>
    %13 = arith.addf %6, %12 : vector<256x128xf32>
    %c0_12 = arith.constant 0 : index
    %c0_13 = arith.constant 0 : index
    %14 = vector.load %arg7[%c0_12, %c0_13] : memref<1x128xf32, #tpu.memory_space<vmem>>, vector<1x128xf32>
    %15 = vector.broadcast %14 : vector<1x128xf32> to vector<256x128xf32>
    %16 = arith.addf %13, %15 : vector<256x128xf32>
    %cst_14 = arith.constant 0.000000e+00 : f32
    %17 = vector.broadcast %cst_14 : f32 to vector<256x128xf32>
    %18 = arith.maximumf %16, %17 : vector<256x128xf32>
    %19 = arith.truncf %18 : vector<256x128xf32> to vector<256x128xbf16>
    %c0_15 = arith.constant 0 : index
    %c0_16 = arith.constant 0 : index
    %20 = vector.load %arg8[%c0_15, %c0_16] : memref<128x128xbf16, #tpu.memory_space<vmem>>, vector<128x128xbf16>
    %cst_17 = arith.constant dense<0.000000e+00> : vector<256x128xf32>
    %21 = tpu.matmul %19, %20, %cst_17 {dimension_numbers = #tpu.dot_dimension_numbers<[1], [0], [0], [1], [0, 0, 1, 1], [], []>} : vector<256x128xbf16>, vector<128x128xbf16>, vector<256x128xf32> -> vector<256x128xf32>
    %c0_18 = arith.constant 0 : index
    %c0_19 = arith.constant 0 : index
    %22 = vector.load %arg9[%c0_18, %c0_19] : memref<1x128xf32, #tpu.memory_space<vmem>>, vector<1x128xf32>
    %23 = vector.broadcast %22 : vector<1x128xf32> to vector<256x128xf32>
    %24 = arith.addf %21, %23 : vector<256x128xf32>
    %cst_20 = arith.constant 0.000000e+00 : f32
    %25 = vector.broadcast %cst_20 : f32 to vector<256x128xf32>
    %26 = arith.maximumf %24, %25 : vector<256x128xf32>
    %27 = arith.truncf %26 : vector<256x128xf32> to vector<256x128xbf16>
    %c0_21 = arith.constant 0 : index
    %c0_22 = arith.constant 0 : index
    %28 = vector.load %arg10[%c0_21, %c0_22] : memref<128x1xbf16, #tpu.memory_space<vmem>>, vector<128x1xbf16>
    %cst_23 = arith.constant dense<0.000000e+00> : vector<256x1xf32>
    %29 = tpu.matmul %27, %28, %cst_23 {dimension_numbers = #tpu.dot_dimension_numbers<[1], [0], [0], [1], [0, 0, 1, 1], [], []>} : vector<256x128xbf16>, vector<128x1xbf16>, vector<256x1xf32> -> vector<256x1xf32>
    %c0_24 = arith.constant 0 : index
    %c0_25 = arith.constant 0 : index
    %30 = vector.load %arg11[%c0_24, %c0_25] : memref<1x1xf32, #tpu.memory_space<vmem>>, vector<1x1xf32>
    %31 = vector.broadcast %30 : vector<1x1xf32> to vector<256x1xf32>
    %32 = arith.addf %29, %31 : vector<256x1xf32>
    %c0_26 = arith.constant 0 : index
    %c0_27 = arith.constant 0 : index
    %33 = vector.load %arg12[%c0_26, %c0_27] : memref<256x1xf32, #tpu.memory_space<vmem>>, vector<256x1xf32>
    tpu.vector_store %arg12[%c0_26, %c0_27], %32 {strides = array<i32>} : memref<256x1xf32, #tpu.memory_space<vmem>>, vector<256x1xf32>,
    return
  }
  func.func @transform_0(%arg0: i32) -> (i32, i32) {
    %c0_i32 = arith.constant 0 : i32
    %c0_i32_0 = arith.constant 0 : i32
    return %arg0, %c0_i32 : i32, i32
  }
  func.func @transform_1(%arg0: i32) -> (i32, i32) {
    %c0_i32 = arith.constant 0 : i32
    %c0_i32_0 = arith.constant 0 : i32
    return %arg0, %c0_i32 : i32, i32
  }
  func.func @transform_2(%arg0: i32) -> (i32, i32) {
    %c0_i32 = arith.constant 0 : i32
    %c0_i32_0 = arith.constant 0 : i32
    return %arg0, %c0_i32 : i32, i32
  }
  func.func @transform_3(%arg0: i32) -> (i32, i32) {
    %c0_i32 = arith.constant 0 : i32
    %c0_i32_0 = arith.constant 0 : i32
    %c0_i32_1 = arith.constant 0 : i32
    return %c0_i32, %c0_i32_0 : i32, i32
  }
  func.func @transform_4(%arg0: i32) -> (i32, i32) {
    %c0_i32 = arith.constant 0 : i32
    %c0_i32_0 = arith.constant 0 : i32
    %c0_i32_1 = arith.constant 0 : i32
    return %c0_i32, %c0_i32_0 : i32, i32
  }
  func.func @transform_5(%arg0: i32) -> (i32, i32) {
    %c0_i32 = arith.constant 0 : i32
    %c0_i32_0 = arith.constant 0 : i32
    %c0_i32_1 = arith.constant 0 : i32
    return %c0_i32, %c0_i32_0 : i32, i32
  }
  func.func @transform_6(%arg0: i32) -> (i32, i32) {
    %c0_i32 = arith.constant 0 : i32
    %c0_i32_0 = arith.constant 0 : i32
    %c0_i32_1 = arith.constant 0 : i32
    return %c0_i32, %c0_i32_0 : i32, i32
  }
  func.func @transform_7(%arg0: i32) -> (i32, i32) {
    %c0_i32 = arith.constant 0 : i32
    %c0_i32_0 = arith.constant 0 : i32
    %c0_i32_1 = arith.constant 0 : i32
    return %c0_i32, %c0_i32_0 : i32, i32
  }
  func.func @transform_8(%arg0: i32) -> (i32, i32) {
    %c0_i32 = arith.constant 0 : i32
    %c0_i32_0 = arith.constant 0 : i32
    %c0_i32_1 = arith.constant 0 : i32
    return %c0_i32, %c0_i32_0 : i32, i32
  }
  func.func @transform_9(%arg0: i32) -> (i32, i32) {
    %c0_i32 = arith.constant 0 : i32
    %c0_i32_0 = arith.constant 0 : i32
    %c0_i32_1 = arith.constant 0 : i32
    return %c0_i32, %c0_i32_0 : i32, i32
  }
  func.func @transform_10(%arg0: i32) -> (i32, i32) {
    %c0_i32 = arith.constant 0 : i32
    %c0_i32_0 = arith.constant 0 : i32
    %c0_i32_1 = arith.constant 0 : i32
    return %c0_i32, %c0_i32_0 : i32, i32
  }
  func.func @transform_11(%arg0: i32) -> (i32, i32) {
    %c0_i32 = arith.constant 0 : i32
    %c0_i32_0 = arith.constant 0 : i32
    return %arg0, %c0_i32 : i32, i32
  }
}

</mosaic_0001>

<llo_original>
// kernel: _reward_forward_impl.1
$region0: #{_reward_forward_impl.1}
  #allocation0 [shape = 'u32[]', space=smem, size = 0x4, offset = 0x4, fixed_abs, tag = 'smem constant byte address 0x4 - core index']
  #allocation1 [shape = 'u32[144,128]{1,0:T(1,128)}', space=vmem, size = 0x12000, scoped, tag = 'internal scratch']
  #allocation2 [shape = 'f32[1,1]{1,0:T(1,128)S(1)}', space=vmem, size = 0x200, scoped, tag = 'scoped memory for _reward_forward_impl.1']
  %s0 = inlined_call_operand.vmem [shape: bf16[256,16], index: 0, kind: input, shape index: {}]
  %s1 = inlined_call_operand.vmem [shape: bf16[256,16], index: 1, kind: input, shape index: {}]
  %s2 = inlined_call_operand.vmem [shape: bf16[256,1], index: 2, kind: input, shape index: {}]
  %s3 = inlined_call_operand.vmem [shape: bf16[16,128], index: 3, kind: input, shape index: {}]
  %s4 = inlined_call_operand.vmem [shape: bf16[16,128], index: 4, kind: input, shape index: {}]
  %s5 = inlined_call_operand.vmem [shape: f32[1,128], index: 5, kind: input, shape index: {}]
  %s6 = inlined_call_operand.vmem [shape: f32[1,128], index: 6, kind: input, shape index: {}]
  %s7 = inlined_call_operand.vmem [shape: bf16[128,128], index: 7, kind: input, shape index: {}]
  %s8 = inlined_call_operand.vmem [shape: f32[1,128], index: 8, kind: input, shape index: {}]
  %s9 = inlined_call_operand.vmem [shape: bf16[128,1], index: 9, kind: input, shape index: {}]
  %s10 = inlined_call_operand.<no memory space> [shape: f32[1,1], index: 10, kind: input, shape index: {}]
  %s11 = inlined_call_operand.vmem [shape: f32[256,1], index: 11, kind: output, shape index: {}]
  %s12 = sld [smem:[#allocation0]]
  $region54: #{_reward_forward_impl.1} parent=0
    _
  %s14 = ssub.s32 1, %s12
  %s15 = scalar_select 0, %s14, %s12
  %v16 = vstv %s10
  %17 = vst [vmem:[#allocation2] sm:$0x1] %v16
  // Predicated region
  $region2: #{_reward_forward_impl.1} parent=0 // pred_check
    _
  $region3: #{_reward_forward_impl.1} parent=0 // pred_check_branch
    %19 = sbr.rel (0) target = $region5
  $region4: #{_reward_forward_impl.1} parent=0 // pred_region
    _
  $region5: #{_reward_forward_impl.1} parent=0 // pred_fallthru
    _
  // Predicated region
  $region6: #{_reward_forward_impl.1} parent=0 // pred_check
    _
  $region7: #{_reward_forward_impl.1} parent=0 // pred_check_branch
    %21 = sbr.rel (0) target = $region9
  $region8: #{_reward_forward_impl.1} parent=0 // pred_region
    _
  $region9: #{_reward_forward_impl.1} parent=0 // pred_fallthru
    _
  // Predicated region
  $region10: #{_reward_forward_impl.1} parent=0 // pred_check
    _
  $region11: #{_reward_forward_impl.1} parent=0 // pred_check_branch
    %23 = sbr.rel (0) target = $region13
  $region12: #{_reward_forward_impl.1} parent=0 // pred_region
    _
  $region13: #{_reward_forward_impl.1} parent=0 // pred_fallthru
    _
  // Predicated region
  $region14: #{_reward_forward_impl.1} parent=0 // pred_check
    _
  $region15: #{_reward_forward_impl.1} parent=0 // pred_check_branch
    %25 = sbr.rel (0) target = $region17
  $region16: #{_reward_forward_impl.1} parent=0 // pred_region
    _
  $region17: #{_reward_forward_impl.1} parent=0 // pred_fallthru
    _
  // Predicated region
  $region18: #{_reward_forward_impl.1} parent=0 // pred_check
    _
  $region19: #{_reward_forward_impl.1} parent=0 // pred_check_branch
    %27 = sbr.rel (0) target = $region21
  $region20: #{_reward_forward_impl.1} parent=0 // pred_region
    _
  $region21: #{_reward_forward_impl.1} parent=0 // pred_fallthru
    _
  // Predicated region
  $region22: #{_reward_forward_impl.1} parent=0 // pred_check
    _
  $region23: #{_reward_forward_impl.1} parent=0 // pred_check_branch
    %29 = sbr.rel (0) target = $region25
  $region24: #{_reward_forward_impl.1} parent=0 // pred_region
    _
  $region25: #{_reward_forward_impl.1} parent=0 // pred_fallthru
    _
  // Predicated region
  $region26: #{_reward_forward_impl.1} parent=0 // pred_check
    _
  $region27: #{_reward_forward_impl.1} parent=0 // pred_check_branch
    %31 = sbr.rel (0) target = $region29
  $region28: #{_reward_forward_impl.1} parent=0 // pred_region
    _
  $region29: #{_reward_forward_impl.1} parent=0 // pred_fallthru
    _
  // Predicated region
  $region30: #{_reward_forward_impl.1} parent=0 // pred_check
    _
  $region31: #{_reward_forward_impl.1} parent=0 // pred_check_branch
    %33 = sbr.rel (0) target = $region33
  $region32: #{_reward_forward_impl.1} parent=0 // pred_region
    _
  $region33: #{_reward_forward_impl.1} parent=0 // pred_fallthru
    _
  // Predicated region
  $region34: #{_reward_forward_impl.1} parent=0 // pred_check
    _
  $region35: #{_reward_forward_impl.1} parent=0 // pred_check_branch
    %35 = sbr.rel (0) target = $region37
  $region36: #{_reward_forward_impl.1} parent=0 // pred_region
    _
  $region37: #{_reward_forward_impl.1} parent=0 // pred_fallthru
    _
  // Predicated region
  $region38: #{_reward_forward_impl.1} parent=0 // pred_check
    _
  $region39: #{_reward_forward_impl.1} parent=0 // pred_check_branch
    %37 = sbr.rel (0) target = $region41
  $region40: #{_reward_forward_impl.1} parent=0 // pred_region
    _
  $region41: #{_reward_forward_impl.1} parent=0 // pred_fallthru
    _
  // Predicated region
  $region42: #{_reward_forward_impl.1} parent=0 // pred_check
    _
  $region43: #{_reward_forward_impl.1} parent=0 // pred_check_branch
    %39 = sbr.rel (0) target = $region45
  $region44: #{_reward_forward_impl.1} parent=0 // pred_region
    _
  $region45: #{_reward_forward_impl.1} parent=0 // pred_fallthru
    _
  %v41 = vld [vmem:[%s0] sm:$0xf]
  %v42 = vld [vmem:[%s0 + $0x4] sm:$0xf]
  %v43 = vld [vmem:[%s0 + $0x8] sm:$0xf]
  %v44 = vld [vmem:[%s0 + $0xc] sm:$0xf]
  %v45 = vld [vmem:[%s0 + $0x10] sm:$0xf]
  %v46 = vld [vmem:[%s0 + $0x14] sm:$0xf]
  %v47 = vld [vmem:[%s0 + $0x18] sm:$0xf]
  %v48 = vld [vmem:[%s0 + $0x1c] sm:$0xf]
  %v49 = vld [vmem:[%s0 + $0x20] sm:$0xf]
  %v50 = vld [vmem:[%s0 + $0x24] sm:$0xf]
  %v51 = vld [vmem:[%s0 + $0x28] sm:$0xf]
  %v52 = vld [vmem:[%s0 + $0x2c] sm:$0xf]
  %v53 = vld [vmem:[%s0 + $0x30] sm:$0xf]
  %v54 = vld [vmem:[%s0 + $0x34] sm:$0xf]
  %v55 = vld [vmem:[%s0 + $0x38] sm:$0xf]
  %v56 = vld [vmem:[%s0 + $0x3c] sm:$0xf]
  %v57 = vld [vmem:[%s0 + $0x40] sm:$0xf]
  %v58 = vld [vmem:[%s0 + $0x44] sm:$0xf]
  %v59 = vld [vmem:[%s0 + $0x48] sm:$0xf]
  %v60 = vld [vmem:[%s0 + $0x4c] sm:$0xf]
  %v61 = vld [vmem:[%s0 + $0x50] sm:$0xf]
  %v62 = vld [vmem:[%s0 + $0x54] sm:$0xf]
  %v63 = vld [vmem:[%s0 + $0x58] sm:$0xf]
  %v64 = vld [vmem:[%s0 + $0x5c] sm:$0xf]
  %v65 = vld [vmem:[%s0 + $0x60] sm:$0xf]
  %v66 = vld [vmem:[%s0 + $0x64] sm:$0xf]
  %v67 = vld [vmem:[%s0 + $0x68] sm:$0xf]
  %v68 = vld [vmem:[%s0 + $0x6c] sm:$0xf]
  %v69 = vld [vmem:[%s0 + $0x70] sm:$0xf]
  %v70 = vld [vmem:[%s0 + $0x74] sm:$0xf]
  %v71 = vld [vmem:[%s0 + $0x78] sm:$0xf]
  %v72 = vld [vmem:[%s0 + $0x7c] sm:$0xf]
  %v73 = vld [vmem:[%s3] sm:$0xf]
  %v74 = vld [vmem:[%s3 + $0x4] sm:$0xf]
  %v75 = vld [vmem:[%s1] sm:$0xf]
  %v76 = vld [vmem:[%s1 + $0x4] sm:$0xf]
  %v77 = vld [vmem:[%s1 + $0x8] sm:$0xf]
  %v78 = vld [vmem:[%s1 + $0xc] sm:$0xf]
  %v79 = vld [vmem:[%s1 + $0x10] sm:$0xf]
  %v80 = vld [vmem:[%s1 + $0x14] sm:$0xf]
  %v81 = vld [vmem:[%s1 + $0x18] sm:$0xf]
  %v82 = vld [vmem:[%s1 + $0x1c] sm:$0xf]
  %v83 = vld [vmem:[%s1 + $0x20] sm:$0xf]
  %v84 = vld [vmem:[%s1 + $0x24] sm:$0xf]
  %v85 = vld [vmem:[%s1 + $0x28] sm:$0xf]
  %v86 = vld [vmem:[%s1 + $0x2c] sm:$0xf]
  %v87 = vld [vmem:[%s1 + $0x30] sm:$0xf]
  %v88 = vld [vmem:[%s1 + $0x34] sm:$0xf]
  %v89 = vld [vmem:[%s1 + $0x38] sm:$0xf]
  %v90 = vld [vmem:[%s1 + $0x3c] sm:$0xf]
  %v91 = vld [vmem:[%s1 + $0x40] sm:$0xf]
  %v92 = vld [vmem:[%s1 + $0x44] sm:$0xf]
  %v93 = vld [vmem:[%s1 + $0x48] sm:$0xf]
  %v94 = vld [vmem:[%s1 + $0x4c] sm:$0xf]
  %v95 = vld [vmem:[%s1 + $0x50] sm:$0xf]
  %v96 = vld [vmem:[%s1 + $0x54] sm:$0xf]
  %v97 = vld [vmem:[%s1 + $0x58] sm:$0xf]
  %v98 = vld [vmem:[%s1 + $0x5c] sm:$0xf]
  %v99 = vld [vmem:[%s1 + $0x60] sm:$0xf]
  %v100 = vld [vmem:[%s1 + $0x64] sm:$0xf]
  %v101 = vld [vmem:[%s1 + $0x68] sm:$0xf]
  %v102 = vld [vmem:[%s1 + $0x6c] sm:$0xf]
  %v103 = vld [vmem:[%s1 + $0x70] sm:$0xf]
  %v104 = vld [vmem:[%s1 + $0x74] sm:$0xf]
  %v105 = vld [vmem:[%s1 + $0x78] sm:$0xf]
  %v106 = vld [vmem:[%s1 + $0x7c] sm:$0xf]
  %v107 = vld [vmem:[%s4] sm:$0xf]
  %v108 = vld [vmem:[%s4 + $0x4] sm:$0xf]
  %v141 = vunpack.c.l.b16 %v75
  %v142 = vunpack.c.l.b16 %v76
  %v143 = vunpack.c.l.b16 %v77
  %v144 = vunpack.c.l.b16 %v78
  %v145 = vunpack.c.l.b16 %v79
  %v146 = vunpack.c.l.b16 %v80
  %v147 = vunpack.c.l.b16 %v81
  %v148 = vunpack.c.l.b16 %v82
  %v149 = vunpack.c.l.b16 %v83
  %v150 = vunpack.c.l.b16 %v84
  %v151 = vunpack.c.l.b16 %v85
  %v152 = vunpack.c.l.b16 %v86
  %v153 = vunpack.c.l.b16 %v87
  %v154 = vunpack.c.l.b16 %v88
  %v155 = vunpack.c.l.b16 %v89
  %v156 = vunpack.c.l.b16 %v90
  %v157 = vunpack.c.l.b16 %v91
  %v158 = vunpack.c.l.b16 %v92
  %v159 = vunpack.c.l.b16 %v93
  %v160 = vunpack.c.l.b16 %v94
  %v161 = vunpack.c.l.b16 %v95
  %v162 = vunpack.c.l.b16 %v96
  %v163 = vunpack.c.l.b16 %v97
  %v164 = vunpack.c.l.b16 %v98
  %v165 = vunpack.c.l.b16 %v99
  %v166 = vunpack.c.l.b16 %v100
  %v167 = vunpack.c.l.b16 %v101
  %v168 = vunpack.c.l.b16 %v102
  %v169 = vunpack.c.l.b16 %v103
  %v170 = vunpack.c.l.b16 %v104
  %v171 = vunpack.c.l.b16 %v105
  %v172 = vunpack.c.l.b16 %v106
  %v173 = vpack.c.b16 %v142, %v141
  %v174 = vpack.c.b16 %v144, %v143
  %v175 = vpack.c.b16 %v146, %v145
  %v176 = vpack.c.b16 %v148, %v147
  %v177 = vpack.c.b16 %v150, %v149
  %v178 = vpack.c.b16 %v152, %v151
  %v179 = vpack.c.b16 %v154, %v153
  %v180 = vpack.c.b16 %v156, %v155
  %v181 = vpack.c.b16 %v158, %v157
  %v182 = vpack.c.b16 %v160, %v159
  %v183 = vpack.c.b16 %v162, %v161
  %v184 = vpack.c.b16 %v164, %v163
  %v185 = vpack.c.b16 %v166, %v165
  %v186 = vpack.c.b16 %v168, %v167
  %v187 = vpack.c.b16 %v170, %v169
  %v188 = vpack.c.b16 %v172, %v171
  %v191 = vunpack.c.l.b16 %v107
  %v192 = vunpack.c.l.b16 %v108
  %v193 = vpack.c.b16 %v192, %v191
  %vm195 = vcmask 130048
  %v197 = vsel %vm195, %v173, 0
  %v200 = vsel %vm195, %v174, 0
  %v203 = vsel %vm195, %v175, 0
  %v206 = vsel %vm195, %v176, 0
  %v209 = vsel %vm195, %v177, 0
  %v212 = vsel %vm195, %v178, 0
  %v215 = vsel %vm195, %v179, 0
  %v218 = vsel %vm195, %v180, 0
  %v221 = vsel %vm195, %v181, 0
  %v224 = vsel %vm195, %v182, 0
  %v227 = vsel %vm195, %v183, 0
  %v230 = vsel %vm195, %v184, 0
  %v233 = vsel %vm195, %v185, 0
  %v236 = vsel %vm195, %v186, 0
  %v239 = vsel %vm195, %v187, 0
  %v242 = vsel %vm195, %v188, 0
  %244 = vmatprep.subr.bf16.mxu0 0
  %245 = vmatpush1.bf16.msra.mxu0 0
  %246 = vmatprep.subr.bf16.mxu0 0
  %247 = vmatpush1.bf16.msra.mxu0 0
  %248 = vmatprep.subr.bf16.mxu0 0
  %249 = vmatpush1.bf16.msra.mxu0 0
  %250 = vmatprep.subr.bf16.mxu0 0
  %251 = vmatpush1.bf16.msra.mxu0 0
  %252 = vmatprep.subr.bf16.mxu0 0
  %253 = vmatpush1.bf16.msra.mxu0 0
  %254 = vmatprep.subr.bf16.mxu0 0
  %255 = vmatpush1.bf16.msra.mxu0 0
  %256 = vmatprep.subr.bf16.mxu0 0
  %257 = vmatpush1.bf16.msra.mxu0 0
  %258 = vmatprep.subr.bf16.mxu0 0
  %259 = vmatpush1.bf16.msra.mxu0 %v193
  %260 = vmatprep.subr.bf16.mxu0 0
  %261 = vmatpush2.bf16.msra.mxu0 0
  %262 = vmatprep.subr.bf16.mxu0 0
  %263 = vmatpush2.bf16.msra.mxu0 0
  %264 = vmatprep.subr.bf16.mxu0 0
  %265 = vmatpush2.bf16.msra.mxu0 0
  %266 = vmatprep.subr.bf16.mxu0 0
  %267 = vmatpush2.bf16.msra.mxu0 0
  %268 = vmatprep.subr.bf16.mxu0 0
  %269 = vmatpush2.bf16.msra.mxu0 0
  %270 = vmatprep.subr.bf16.mxu0 0
  %271 = vmatpush2.bf16.msra.mxu0 0
  %272 = vmatprep.subr.bf16.mxu0 0
  %273 = vmatpush2.bf16.msra.mxu0 0
  %274 = vmatprep.subr.bf16.mxu0 0
  %275 = vmatpush2.bf16.msra.mxu0 0
  %276 = vmatprep.mubr.bf16.mxu0 0
  %277 = vmatmul.mubr.bf16.gmra.mxu0 %v197
  %v278 = vpop.f32.mrf.mxu0
  %v279 = vadd.f32 0.0, %v278
  %v280 = vpop.f32.mrf.mxu0
  %v281 = vpop.f32.mrf.mxu0
  %v282 = vadd.f32 0.0, %v281
  %v283 = vpop.f32.mrf.mxu0
  %284 = vmatprep.mubr.bf16.mxu0 0
  %285 = vmatmul.mubr.bf16.gmra.mxu0 %v200
  %v286 = vpop.f32.mrf.mxu0
  %v287 = vadd.f32 0.0, %v286
  %v288 = vpop.f32.mrf.mxu0
  %v289 = vpop.f32.mrf.mxu0
  %v290 = vadd.f32 0.0, %v289
  %v291 = vpop.f32.mrf.mxu0
  %292 = vmatprep.mubr.bf16.mxu0 0
  %293 = vmatmul.mubr.bf16.gmra.mxu0 %v203
  %v294 = vpop.f32.mrf.mxu0
  %v295 = vadd.f32 0.0, %v294
  %v296 = vpop.f32.mrf.mxu0
  %v297 = vpop.f32.mrf.mxu0
  %v298 = vadd.f32 0.0, %v297
  %v299 = vpop.f32.mrf.mxu0
  %300 = vmatprep.mubr.bf16.mxu0 0
  %301 = vmatmul.mubr.bf16.gmra.mxu0 %v206
  %v302 = vpop.f32.mrf.mxu0
  %v303 = vadd.f32 0.0, %v302
  %v304 = vpop.f32.mrf.mxu0
  %v305 = vpop.f32.mrf.mxu0
  %v306 = vadd.f32 0.0, %v305
  %v307 = vpop.f32.mrf.mxu0
  %308 = vmatprep.mubr.bf16.mxu0 0
  %309 = vmatmul.mubr.bf16.gmra.mxu0 %v209
  %v310 = vpop.f32.mrf.mxu0
  %v311 = vadd.f32 0.0, %v310
  %v312 = vpop.f32.mrf.mxu0
  %v313 = vpop.f32.mrf.mxu0
  %v314 = vadd.f32 0.0, %v313
  %v315 = vpop.f32.mrf.mxu0
  %316 = vmatprep.mubr.bf16.mxu0 0
  %317 = vmatmul.mubr.bf16.gmra.mxu0 %v212
  %v318 = vpop.f32.mrf.mxu0
  %v319 = vadd.f32 0.0, %v318
  %v320 = vpop.f32.mrf.mxu0
  %v321 = vpop.f32.mrf.mxu0
  %v322 = vadd.f32 0.0, %v321
  %v323 = vpop.f32.mrf.mxu0
  %324 = vmatprep.mubr.bf16.mxu0 0
  %325 = vmatmul.mubr.bf16.gmra.mxu0 %v215
  %v326 = vpop.f32.mrf.mxu0
  %v327 = vadd.f32 0.0, %v326
  %v328 = vpop.f32.mrf.mxu0
  %v329 = vpop.f32.mrf.mxu0
  %v330 = vadd.f32 0.0, %v329
  %v331 = vpop.f32.mrf.mxu0
  %332 = vmatprep.mubr.bf16.mxu0 0
  %333 = vmatmul.mubr.bf16.gmra.mxu0 %v218
  %v334 = vpop.f32.mrf.mxu0
  %v335 = vadd.f32 0.0, %v334
  %v336 = vpop.f32.mrf.mxu0
  %v337 = vpop.f32.mrf.mxu0
  %v338 = vadd.f32 0.0, %v337
  %v339 = vpop.f32.mrf.mxu0
  %340 = vmatprep.mubr.bf16.mxu0 0
  %341 = vmatmul.mubr.bf16.gmra.mxu0 %v221
  %v342 = vpop.f32.mrf.mxu0
  %v343 = vadd.f32 0.0, %v342
  %v344 = vpop.f32.mrf.mxu0
  %v345 = vpop.f32.mrf.mxu0
  %v346 = vadd.f32 0.0, %v345
  %v347 = vpop.f32.mrf.mxu0
  %348 = vmatprep.mubr.bf16.mxu0 0
  %349 = vmatmul.mubr.bf16.gmra.mxu0 %v224
  %v350 = vpop.f32.mrf.mxu0
  %v351 = vadd.f32 0.0, %v350
  %v352 = vpop.f32.mrf.mxu0
  %v353 = vpop.f32.mrf.mxu0
  %v354 = vadd.f32 0.0, %v353
  %v355 = vpop.f32.mrf.mxu0
  %356 = vmatprep.mubr.bf16.mxu0 0
  %357 = vmatmul.mubr.bf16.gmra.mxu0 %v227
  %v358 = vpop.f32.mrf.mxu0
  %v359 = vadd.f32 0.0, %v358
  %v360 = vpop.f32.mrf.mxu0
  %v361 = vpop.f32.mrf.mxu0
  %v362 = vadd.f32 0.0, %v361
  %v363 = vpop.f32.mrf.mxu0
  %364 = vmatprep.mubr.bf16.mxu0 0
  %365 = vmatmul.mubr.bf16.gmra.mxu0 %v230
  %v366 = vpop.f32.mrf.mxu0
  %v367 = vadd.f32 0.0, %v366
  %v368 = vpop.f32.mrf.mxu0
  %v369 = vpop.f32.mrf.mxu0
  %v370 = vadd.f32 0.0, %v369
  %v371 = vpop.f32.mrf.mxu0
  %372 = vmatprep.mubr.bf16.mxu0 0
  %373 = vmatmul.mubr.bf16.gmra.mxu0 %v233
  %v374 = vpop.f32.mrf.mxu0
  %v375 = vadd.f32 0.0, %v374
  %v376 = vpop.f32.mrf.mxu0
  %v377 = vpop.f32.mrf.mxu0
  %v378 = vadd.f32 0.0, %v377
  %v379 = vpop.f32.mrf.mxu0
  %380 = vmatprep.mubr.bf16.mxu0 0
  %381 = vmatmul.mubr.bf16.gmra.mxu0 %v236
  %v382 = vpop.f32.mrf.mxu0
  %v383 = vadd.f32 0.0, %v382
  %v384 = vpop.f32.mrf.mxu0
  %v385 = vpop.f32.mrf.mxu0
  %v386 = vadd.f32 0.0, %v385
  %v387 = vpop.f32.mrf.mxu0
  %388 = vmatprep.mubr.bf16.mxu0 0
  %389 = vmatmul.mubr.bf16.gmra.mxu0 %v239
  %v390 = vpop.f32.mrf.mxu0
  %v391 = vadd.f32 0.0, %v390
  %v392 = vpop.f32.mrf.mxu0
  %v393 = vpop.f32.mrf.mxu0
  %v394 = vadd.f32 0.0, %v393
  %v395 = vpop.f32.mrf.mxu0
  %396 = vmatprep.mubr.bf16.mxu0 0
  %397 = vmatmul.mubr.bf16.gmra.mxu0 %v242
  %v398 = vpop.f32.mrf.mxu0
  %v399 = vadd.f32 0.0, %v398
  %v400 = vpop.f32.mrf.mxu0
  %v401 = vpop.f32.mrf.mxu0
  %v402 = vadd.f32 0.0, %v401
  %v403 = vpop.f32.mrf.mxu0
  %404 = vdwg.mxu0
  %v437 = vunpack.c.l.b16 %v41
  %v438 = vunpack.c.l.b16 %v42
  %v439 = vunpack.c.l.b16 %v43
  %v440 = vunpack.c.l.b16 %v44
  %v441 = vunpack.c.l.b16 %v45
  %v442 = vunpack.c.l.b16 %v46
  %v443 = vunpack.c.l.b16 %v47
  %v444 = vunpack.c.l.b16 %v48
  %v445 = vunpack.c.l.b16 %v49
  %v446 = vunpack.c.l.b16 %v50
  %v447 = vunpack.c.l.b16 %v51
  %v448 = vunpack.c.l.b16 %v52
  %v449 = vunpack.c.l.b16 %v53
  %v450 = vunpack.c.l.b16 %v54
  %v451 = vunpack.c.l.b16 %v55
  %v452 = vunpack.c.l.b16 %v56
  %v453 = vunpack.c.l.b16 %v57
  %v454 = vunpack.c.l.b16 %v58
  %v455 = vunpack.c.l.b16 %v59
  %v456 = vunpack.c.l.b16 %v60
  %v457 = vunpack.c.l.b16 %v61
  %v458 = vunpack.c.l.b16 %v62
  %v459 = vunpack.c.l.b16 %v63
  %v460 = vunpack.c.l.b16 %v64
  %v461 = vunpack.c.l.b16 %v65
  %v462 = vunpack.c.l.b16 %v66
  %v463 = vunpack.c.l.b16 %v67
  %v464 = vunpack.c.l.b16 %v68
  %v465 = vunpack.c.l.b16 %v69
  %v466 = vunpack.c.l.b16 %v70
  %v467 = vunpack.c.l.b16 %v71
  %v468 = vunpack.c.l.b16 %v72
  %v469 = vpack.c.b16 %v438, %v437
  %v470 = vpack.c.b16 %v440, %v439
  %v471 = vpack.c.b16 %v442, %v441
  %v472 = vpack.c.b16 %v444, %v443
  %v473 = vpack.c.b16 %v446, %v445
  %v474 = vpack.c.b16 %v448, %v447
  %v475 = vpack.c.b16 %v450, %v449
  %v476 = vpack.c.b16 %v452, %v451
  %v477 = vpack.c.b16 %v454, %v453
  %v478 = vpack.c.b16 %v456, %v455
  %v479 = vpack.c.b16 %v458, %v457
  %v480 = vpack.c.b16 %v460, %v459
  %v481 = vpack.c.b16 %v462, %v461
  %v482 = vpack.c.b16 %v464, %v463
  %v483 = vpack.c.b16 %v466, %v465
  %v484 = vpack.c.b16 %v468, %v467
  %v487 = vunpack.c.l.b16 %v73
  %v488 = vunpack.c.l.b16 %v74
  %v489 = vpack.c.b16 %v488, %v487
  %v492 = vsel %vm195, %v469, 0
  %v495 = vsel %vm195, %v470, 0
  %v498 = vsel %vm195, %v471, 0
  %v501 = vsel %vm195, %v472, 0
  %v504 = vsel %vm195, %v473, 0
  %v507 = vsel %vm195, %v474, 0
  %v510 = vsel %vm195, %v475, 0
  %v513 = vsel %vm195, %v476, 0
  %v516 = vsel %vm195, %v477, 0
  %v519 = vsel %vm195, %v478, 0
  %v522 = vsel %vm195, %v479, 0
  %v525 = vsel %vm195, %v480, 0
  %v528 = vsel %vm195, %v481, 0
  %v531 = vsel %vm195, %v482, 0
  %v534 = vsel %vm195, %v483, 0
  %v537 = vsel %vm195, %v484, 0
  %539 = vmatprep.subr.bf16.mxu0 0
  %540 = vmatpush1.bf16.msra.mxu0 0
  %541 = vmatprep.subr.bf16.mxu0 0
  %542 = vmatpush1.bf16.msra.mxu0 0
  %543 = vmatprep.subr.bf16.mxu0 0
  %544 = vmatpush1.bf16.msra.mxu0 0
  %545 = vmatprep.subr.bf16.mxu0 0
  %546 = vmatpush1.bf16.msra.mxu0 0
  %547 = vmatprep.subr.bf16.mxu0 0
  %548 = vmatpush1.bf16.msra.mxu0 0
  %549 = vmatprep.subr.bf16.mxu0 0
  %550 = vmatpush1.bf16.msra.mxu0 0
  %551 = vmatprep.subr.bf16.mxu0 0
  %552 = vmatpush1.bf16.msra.mxu0 0
  %553 = vmatprep.subr.bf16.mxu0 0
  %554 = vmatpush1.bf16.msra.mxu0 %v489
  %555 = vmatprep.subr.bf16.mxu0 0
  %556 = vmatpush2.bf16.msra.mxu0 0
  %557 = vmatprep.subr.bf16.mxu0 0
  %558 = vmatpush2.bf16.msra.mxu0 0
  %559 = vmatprep.subr.bf16.mxu0 0
  %560 = vmatpush2.bf16.msra.mxu0 0
  %561 = vmatprep.subr.bf16.mxu0 0
  %562 = vmatpush2.bf16.msra.mxu0 0
  %563 = vmatprep.subr.bf16.mxu0 0
  %564 = vmatpush2.bf16.msra.mxu0 0
  %565 = vmatprep.subr.bf16.mxu0 0
  %566 = vmatpush2.bf16.msra.mxu0 0
  %567 = vmatprep.subr.bf16.mxu0 0
  %568 = vmatpush2.bf16.msra.mxu0 0
  %569 = vmatprep.subr.bf16.mxu0 0
  %570 = vmatpush2.bf16.msra.mxu0 0
  %571 = vmatprep.mubr.bf16.mxu0 0
  %572 = vmatmul.mubr.bf16.gmra.mxu0 %v492
  %v573 = vpop.f32.mrf.mxu0
  %v574 = vadd.f32 %v279, %v573
  %v575 = vpop.f32.mrf.mxu0
  %v576 = vpop.f32.mrf.mxu0
  %v577 = vadd.f32 %v282, %v576
  %v578 = vpop.f32.mrf.mxu0
  %579 = vmatprep.mubr.bf16.mxu0 0
  %580 = vmatmul.mubr.bf16.gmra.mxu0 %v495
  %v581 = vpop.f32.mrf.mxu0
  %v582 = vadd.f32 %v287, %v581
  %v583 = vpop.f32.mrf.mxu0
  %v584 = vpop.f32.mrf.mxu0
  %v585 = vadd.f32 %v290, %v584
  %v586 = vpop.f32.mrf.mxu0
  %587 = vmatprep.mubr.bf16.mxu0 0
  %588 = vmatmul.mubr.bf16.gmra.mxu0 %v498
  %v589 = vpop.f32.mrf.mxu0
  %v590 = vadd.f32 %v295, %v589
  %v591 = vpop.f32.mrf.mxu0
  %v592 = vpop.f32.mrf.mxu0
  %v593 = vadd.f32 %v298, %v592
  %v594 = vpop.f32.mrf.mxu0
  %595 = vmatprep.mubr.bf16.mxu0 0
  %596 = vmatmul.mubr.bf16.gmra.mxu0 %v501
  %v597 = vpop.f32.mrf.mxu0
  %v598 = vadd.f32 %v303, %v597
  %v599 = vpop.f32.mrf.mxu0
  %v600 = vpop.f32.mrf.mxu0
  %v601 = vadd.f32 %v306, %v600
  %v602 = vpop.f32.mrf.mxu0
  %603 = vmatprep.mubr.bf16.mxu0 0
  %604 = vmatmul.mubr.bf16.gmra.mxu0 %v504
  %v605 = vpop.f32.mrf.mxu0
  %v606 = vadd.f32 %v311, %v605
  %v607 = vpop.f32.mrf.mxu0
  %v608 = vpop.f32.mrf.mxu0
  %v609 = vadd.f32 %v314, %v608
  %v610 = vpop.f32.mrf.mxu0
  %611 = vmatprep.mubr.bf16.mxu0 0
  %612 = vmatmul.mubr.bf16.gmra.mxu0 %v507
  %v613 = vpop.f32.mrf.mxu0
  %v614 = vadd.f32 %v319, %v613
  %v615 = vpop.f32.mrf.mxu0
  %v616 = vpop.f32.mrf.mxu0
  %v617 = vadd.f32 %v322, %v616
  %v618 = vpop.f32.mrf.mxu0
  %619 = vmatprep.mubr.bf16.mxu0 0
  %620 = vmatmul.mubr.bf16.gmra.mxu0 %v510
  %v621 = vpop.f32.mrf.mxu0
  %v622 = vadd.f32 %v327, %v621
  %v623 = vpop.f32.mrf.mxu0
  %v624 = vpop.f32.mrf.mxu0
  %v625 = vadd.f32 %v330, %v624
  %v626 = vpop.f32.mrf.mxu0
  %627 = vmatprep.mubr.bf16.mxu0 0
  %628 = vmatmul.mubr.bf16.gmra.mxu0 %v513
  %v629 = vpop.f32.mrf.mxu0
  %v630 = vadd.f32 %v335, %v629
  %v631 = vpop.f32.mrf.mxu0
  %v632 = vpop.f32.mrf.mxu0
  %v633 = vadd.f32 %v338, %v632
  %v634 = vpop.f32.mrf.mxu0
  %635 = vmatprep.mubr.bf16.mxu0 0
  %636 = vmatmul.mubr.bf16.gmra.mxu0 %v516
  %v637 = vpop.f32.mrf.mxu0
  %v638 = vadd.f32 %v343, %v637
  %v639 = vpop.f32.mrf.mxu0
  %v640 = vpop.f32.mrf.mxu0
  %v641 = vadd.f32 %v346, %v640
  %v642 = vpop.f32.mrf.mxu0
  %643 = vmatprep.mubr.bf16.mxu0 0
  %644 = vmatmul.mubr.bf16.gmra.mxu0 %v519
  %v645 = vpop.f32.mrf.mxu0
  %v646 = vadd.f32 %v351, %v645
  %v647 = vpop.f32.mrf.mxu0
  %v648 = vpop.f32.mrf.mxu0
  %v649 = vadd.f32 %v354, %v648
  %v650 = vpop.f32.mrf.mxu0
  %651 = vmatprep.mubr.bf16.mxu0 0
  %652 = vmatmul.mubr.bf16.gmra.mxu0 %v522
  %v653 = vpop.f32.mrf.mxu0
  %v654 = vadd.f32 %v359, %v653
  %v655 = vpop.f32.mrf.mxu0
  %v656 = vpop.f32.mrf.mxu0
  %v657 = vadd.f32 %v362, %v656
  %v658 = vpop.f32.mrf.mxu0
  %659 = vmatprep.mubr.bf16.mxu0 0
  %660 = vmatmul.mubr.bf16.gmra.mxu0 %v525
  %v661 = vpop.f32.mrf.mxu0
  %v662 = vadd.f32 %v367, %v661
  %v663 = vpop.f32.mrf.mxu0
  %v664 = vpop.f32.mrf.mxu0
  %v665 = vadd.f32 %v370, %v664
  %v666 = vpop.f32.mrf.mxu0
  %667 = vmatprep.mubr.bf16.mxu0 0
  %668 = vmatmul.mubr.bf16.gmra.mxu0 %v528
  %v669 = vpop.f32.mrf.mxu0
  %v670 = vadd.f32 %v375, %v669
  %v671 = vpop.f32.mrf.mxu0
  %v672 = vpop.f32.mrf.mxu0
  %v673 = vadd.f32 %v378, %v672
  %v674 = vpop.f32.mrf.mxu0
  %675 = vmatprep.mubr.bf16.mxu0 0
  %676 = vmatmul.mubr.bf16.gmra.mxu0 %v531
  %v677 = vpop.f32.mrf.mxu0
  %v678 = vadd.f32 %v383, %v677
  %v679 = vpop.f32.mrf.mxu0
  %v680 = vpop.f32.mrf.mxu0
  %v681 = vadd.f32 %v386, %v680
  %v682 = vpop.f32.mrf.mxu0
  %683 = vmatprep.mubr.bf16.mxu0 0
  %684 = vmatmul.mubr.bf16.gmra.mxu0 %v534
  %v685 = vpop.f32.mrf.mxu0
  %v686 = vadd.f32 %v391, %v685
  %v687 = vpop.f32.mrf.mxu0
  %v688 = vpop.f32.mrf.mxu0
  %v689 = vadd.f32 %v394, %v688
  %v690 = vpop.f32.mrf.mxu0
  %691 = vmatprep.mubr.bf16.mxu0 0
  %692 = vmatmul.mubr.bf16.gmra.mxu0 %v537
  %v693 = vpop.f32.mrf.mxu0
  %v694 = vadd.f32 %v399, %v693
  %v695 = vpop.f32.mrf.mxu0
  %v696 = vpop.f32.mrf.mxu0
  %v697 = vadd.f32 %v402, %v696
  %v698 = vpop.f32.mrf.mxu0
  %699 = vdwg.mxu0
  %v700 = vld [vmem:[%s2] sm:$0xf]
  %v701 = vld [vmem:[%s2 + $0x4] sm:$0xf]
  %v702 = vld [vmem:[%s2 + $0x8] sm:$0xf]
  %v703 = vld [vmem:[%s2 + $0xc] sm:$0xf]
  %v704 = vld [vmem:[%s2 + $0x10] sm:$0xf]
  %v705 = vld [vmem:[%s2 + $0x14] sm:$0xf]
  %v706 = vld [vmem:[%s2 + $0x18] sm:$0xf]
  %v707 = vld [vmem:[%s2 + $0x1c] sm:$0xf]
  %v708 = vld [vmem:[%s2 + $0x20] sm:$0xf]
  %v709 = vld [vmem:[%s2 + $0x24] sm:$0xf]
  %v710 = vld [vmem:[%s2 + $0x28] sm:$0xf]
  %v711 = vld [vmem:[%s2 + $0x2c] sm:$0xf]
  %v712 = vld [vmem:[%s2 + $0x30] sm:$0xf]
  %v713 = vld [vmem:[%s2 + $0x34] sm:$0xf]
  %v714 = vld [vmem:[%s2 + $0x38] sm:$0xf]
  %v715 = vld [vmem:[%s2 + $0x3c] sm:$0xf]
  %v716 = vld [vmem:[%s2 + $0x40] sm:$0xf]
  %v717 = vld [vmem:[%s2 + $0x44] sm:$0xf]
  %v718 = vld [vmem:[%s2 + $0x48] sm:$0xf]
  %v719 = vld [vmem:[%s2 + $0x4c] sm:$0xf]
  %v720 = vld [vmem:[%s2 + $0x50] sm:$0xf]
  %v721 = vld [vmem:[%s2 + $0x54] sm:$0xf]
  %v722 = vld [vmem:[%s2 + $0x58] sm:$0xf]
  %v723 = vld [vmem:[%s2 + $0x5c] sm:$0xf]
  %v724 = vld [vmem:[%s2 + $0x60] sm:$0xf]
  %v725 = vld [vmem:[%s2 + $0x64] sm:$0xf]
  %v726 = vld [vmem:[%s2 + $0x68] sm:$0xf]
  %v727 = vld [vmem:[%s2 + $0x6c] sm:$0xf]
  %v728 = vld [vmem:[%s2 + $0x70] sm:$0xf]
  %v729 = vld [vmem:[%s2 + $0x74] sm:$0xf]
  %v730 = vld [vmem:[%s2 + $0x78] sm:$0xf]
  %v731 = vld [vmem:[%s2 + $0x7c] sm:$0xf]
  %v732 = vunpack.c.l.bf16 %v700
  %v733 = vunpack.c.l.bf16 %v701
  %v734 = vunpack.c.l.bf16 %v702
  %v735 = vunpack.c.l.bf16 %v703
  %v736 = vunpack.c.l.bf16 %v704
  %v737 = vunpack.c.l.bf16 %v705
  %v738 = vunpack.c.l.bf16 %v706
  %v739 = vunpack.c.l.bf16 %v707
  %v740 = vunpack.c.l.bf16 %v708
  %v741 = vunpack.c.l.bf16 %v709
  %v742 = vunpack.c.l.bf16 %v710
  %v743 = vunpack.c.l.bf16 %v711
  %v744 = vunpack.c.l.bf16 %v712
  %v745 = vunpack.c.l.bf16 %v713
  %v746 = vunpack.c.l.bf16 %v714
  %v747 = vunpack.c.l.bf16 %v715
  %v748 = vunpack.c.l.bf16 %v716
  %v749 = vunpack.c.l.bf16 %v717
  %v750 = vunpack.c.l.bf16 %v718
  %v751 = vunpack.c.l.bf16 %v719
  %v752 = vunpack.c.l.bf16 %v720
  %v753 = vunpack.c.l.bf16 %v721
  %v754 = vunpack.c.l.bf16 %v722
  %v755 = vunpack.c.l.bf16 %v723
  %v756 = vunpack.c.l.bf16 %v724
  %v757 = vunpack.c.l.bf16 %v725
  %v758 = vunpack.c.l.bf16 %v726
  %v759 = vunpack.c.l.bf16 %v727
  %v760 = vunpack.c.l.bf16 %v728
  %v761 = vunpack.c.l.bf16 %v729
  %v762 = vunpack.c.l.bf16 %v730
  %v763 = vunpack.c.l.bf16 %v731
  %v764 = vld [vmem:[%s5] sm:$0x1]
  %766 = vset.pattern.permute.xlu0 0
  %767 = vperm.xlu0 %766, %v732
  %v768 = vpop.permute.xlu0 %767
  %771 = vset.pattern.permute.xlu0 0
  %772 = vperm.xlu0 %771, %v733
  %v773 = vpop.permute.xlu0 %772
  %776 = vset.pattern.permute.xlu0 0
  %777 = vperm.xlu0 %776, %v734
  %v778 = vpop.permute.xlu0 %777
  %781 = vset.pattern.permute.xlu0 0
  %782 = vperm.xlu0 %781, %v735
  %v783 = vpop.permute.xlu0 %782
  %786 = vset.pattern.permute.xlu0 0
  %787 = vperm.xlu0 %786, %v736
  %v788 = vpop.permute.xlu0 %787
  %791 = vset.pattern.permute.xlu0 0
  %792 = vperm.xlu0 %791, %v737
  %v793 = vpop.permute.xlu0 %792
  %796 = vset.pattern.permute.xlu0 0
  %797 = vperm.xlu0 %796, %v738
  %v798 = vpop.permute.xlu0 %797
  %801 = vset.pattern.permute.xlu0 0
  %802 = vperm.xlu0 %801, %v739
  %v803 = vpop.permute.xlu0 %802
  %806 = vset.pattern.permute.xlu0 0
  %807 = vperm.xlu0 %806, %v740
  %v808 = vpop.permute.xlu0 %807
  %811 = vset.pattern.permute.xlu0 0
  %812 = vperm.xlu0 %811, %v741
  %v813 = vpop.permute.xlu0 %812
  %816 = vset.pattern.permute.xlu0 0
  %817 = vperm.xlu0 %816, %v742
  %v818 = vpop.permute.xlu0 %817
  %821 = vset.pattern.permute.xlu0 0
  %822 = vperm.xlu0 %821, %v743
  %v823 = vpop.permute.xlu0 %822
  %826 = vset.pattern.permute.xlu0 0
  %827 = vperm.xlu0 %826, %v744
  %v828 = vpop.permute.xlu0 %827
  %831 = vset.pattern.permute.xlu0 0
  %832 = vperm.xlu0 %831, %v745
  %v833 = vpop.permute.xlu0 %832
  %836 = vset.pattern.permute.xlu0 0
  %837 = vperm.xlu0 %836, %v746
  %v838 = vpop.permute.xlu0 %837
  %841 = vset.pattern.permute.xlu0 0
  %842 = vperm.xlu0 %841, %v747
  %v843 = vpop.permute.xlu0 %842
  %846 = vset.pattern.permute.xlu0 0
  %847 = vperm.xlu0 %846, %v748
  %v848 = vpop.permute.xlu0 %847
  %851 = vset.pattern.permute.xlu0 0
  %852 = vperm.xlu0 %851, %v749
  %v853 = vpop.permute.xlu0 %852
  %856 = vset.pattern.permute.xlu0 0
  %857 = vperm.xlu0 %856, %v750
  %v858 = vpop.permute.xlu0 %857
  %861 = vset.pattern.permute.xlu0 0
  %862 = vperm.xlu0 %861, %v751
  %v863 = vpop.permute.xlu0 %862
  %866 = vset.pattern.permute.xlu0 0
  %867 = vperm.xlu0 %866, %v752
  %v868 = vpop.permute.xlu0 %867
  %871 = vset.pattern.permute.xlu0 0
  %872 = vperm.xlu0 %871, %v753
  %v873 = vpop.permute.xlu0 %872
  %876 = vset.pattern.permute.xlu0 0
  %877 = vperm.xlu0 %876, %v754
  %v878 = vpop.permute.xlu0 %877
  %881 = vset.pattern.permute.xlu0 0
  %882 = vperm.xlu0 %881, %v755
  %v883 = vpop.permute.xlu0 %882
  %886 = vset.pattern.permute.xlu0 0
  %887 = vperm.xlu0 %886, %v756
  %v888 = vpop.permute.xlu0 %887
  %891 = vset.pattern.permute.xlu0 0
  %892 = vperm.xlu0 %891, %v757
  %v893 = vpop.permute.xlu0 %892
  %896 = vset.pattern.permute.xlu0 0
  %897 = vperm.xlu0 %896, %v758
  %v898 = vpop.permute.xlu0 %897
  %901 = vset.pattern.permute.xlu0 0
  %902 = vperm.xlu0 %901, %v759
  %v903 = vpop.permute.xlu0 %902
  %906 = vset.pattern.permute.xlu0 0
  %907 = vperm.xlu0 %906, %v760
  %v908 = vpop.permute.xlu0 %907
  %911 = vset.pattern.permute.xlu0 0
  %912 = vperm.xlu0 %911, %v761
  %v913 = vpop.permute.xlu0 %912
  %916 = vset.pattern.permute.xlu0 0
  %917 = vperm.xlu0 %916, %v762
  %v918 = vpop.permute.xlu0 %917
  %921 = vset.pattern.permute.xlu0 0
  %922 = vperm.xlu0 %921, %v763
  %v923 = vpop.permute.xlu0 %922
  %v926 = vlaneseq
  %v927 = vshrl.u32 %v926, 7
  %v928 = vsub.s32 0, %v927
  %v929 = vrot.slane %v764, %v928
  %v931 = vmul.f32 %v768, %v929
  %v932 = vmul.f32 %v773, %v929
  %v933 = vmul.f32 %v778, %v929
  %v934 = vmul.f32 %v783, %v929
  %v935 = vmul.f32 %v788, %v929
  %v936 = vmul.f32 %v793, %v929
  %v937 = vmul.f32 %v798, %v929
  %v938 = vmul.f32 %v803, %v929
  %v939 = vmul.f32 %v808, %v929
  %v940 = vmul.f32 %v813, %v929
  %v941 = vmul.f32 %v818, %v929
  %v942 = vmul.f32 %v823, %v929
  %v943 = vmul.f32 %v828, %v929
  %v944 = vmul.f32 %v833, %v929
  %v945 = vmul.f32 %v838, %v929
  %v946 = vmul.f32 %v843, %v929
  %v947 = vmul.f32 %v848, %v929
  %v948 = vmul.f32 %v853, %v929
  %v949 = vmul.f32 %v858, %v929
  %v950 = vmul.f32 %v863, %v929
  %v951 = vmul.f32 %v868, %v929
  %v952 = vmul.f32 %v873, %v929
  %v953 = vmul.f32 %v878, %v929
  %v954 = vmul.f32 %v883, %v929
  %v955 = vmul.f32 %v888, %v929
  %v956 = vmul.f32 %v893, %v929
  %v957 = vmul.f32 %v898, %v929
  %v958 = vmul.f32 %v903, %v929
  %v959 = vmul.f32 %v908, %v929
  %v960 = vmul.f32 %v913, %v929
  %v961 = vmul.f32 %v918, %v929
  %v962 = vmul.f32 %v923, %v929
  %v963 = vadd.f32 %v574, %v931
  %v964 = vadd.f32 %v577, %v932
  %v965 = vadd.f32 %v582, %v933
  %v966 = vadd.f32 %v585, %v934
  %v967 = vadd.f32 %v590, %v935
  %v968 = vadd.f32 %v593, %v936
  %v969 = vadd.f32 %v598, %v937
  %v970 = vadd.f32 %v601, %v938
  %v971 = vadd.f32 %v606, %v939
  %v972 = vadd.f32 %v609, %v940
  %v973 = vadd.f32 %v614, %v941
  %v974 = vadd.f32 %v617, %v942
  %v975 = vadd.f32 %v622, %v943
  %v976 = vadd.f32 %v625, %v944
  %v977 = vadd.f32 %v630, %v945
  %v978 = vadd.f32 %v633, %v946
  %v979 = vadd.f32 %v638, %v947
  %v980 = vadd.f32 %v641, %v948
  %v981 = vadd.f32 %v646, %v949
  %v982 = vadd.f32 %v649, %v950
  %v983 = vadd.f32 %v654, %v951
  %v984 = vadd.f32 %v657, %v952
  %v985 = vadd.f32 %v662, %v953
  %v986 = vadd.f32 %v665, %v954
  %v987 = vadd.f32 %v670, %v955
  %v988 = vadd.f32 %v673, %v956
  %v989 = vadd.f32 %v678, %v957
  %v990 = vadd.f32 %v681, %v958
  %v991 = vadd.f32 %v686, %v959
  %v992 = vadd.f32 %v689, %v960
  %v993 = vadd.f32 %v694, %v961
  %v994 = vadd.f32 %v697, %v962
  %v995 = vld [vmem:[%s6] sm:$0x1]
  %v997 = vlaneseq
  %v998 = vshrl.u32 %v997, 7
  %v999 = vsub.s32 0, %v998
  %v1000 = vrot.slane %v995, %v999
  %v1002 = vadd.f32 %v963, %v1000
  %v1003 = vadd.f32 %v964, %v1000
  %v1004 = vadd.f32 %v965, %v1000
  %v1005 = vadd.f32 %v966, %v1000
  %v1006 = vadd.f32 %v967, %v1000
  %v1007 = vadd.f32 %v968, %v1000
  %v1008 = vadd.f32 %v969, %v1000
  %v1009 = vadd.f32 %v970, %v1000
  %v1010 = vadd.f32 %v971, %v1000
  %v1011 = vadd.f32 %v972, %v1000
  %v1012 = vadd.f32 %v973, %v1000
  %v1013 = vadd.f32 %v974, %v1000
  %v1014 = vadd.f32 %v975, %v1000
  %v1015 = vadd.f32 %v976, %v1000
  %v1016 = vadd.f32 %v977, %v1000
  %v1017 = vadd.f32 %v978, %v1000
  %v1018 = vadd.f32 %v979, %v1000
  %v1019 = vadd.f32 %v980, %v1000
  %v1020 = vadd.f32 %v981, %v1000
  %v1021 = vadd.f32 %v982, %v1000
  %v1022 = vadd.f32 %v983, %v1000
  %v1023 = vadd.f32 %v984, %v1000
  %v1024 = vadd.f32 %v985, %v1000
  %v1025 = vadd.f32 %v986, %v1000
  %v1026 = vadd.f32 %v987, %v1000
  %v1027 = vadd.f32 %v988, %v1000
  %v1028 = vadd.f32 %v989, %v1000
  %v1029 = vadd.f32 %v990, %v1000
  %v1030 = vadd.f32 %v991, %v1000
  %v1031 = vadd.f32 %v992, %v1000
  %v1032 = vadd.f32 %v993, %v1000
  %v1033 = vadd.f32 %v994, %v1000
  %v1034 = vmax.f32 %v1002, 0.0
  %v1035 = vmax.f32 %v1003, 0.0
  %v1036 = vmax.f32 %v1004, 0.0
  %v1037 = vmax.f32 %v1005, 0.0
  %v1038 = vmax.f32 %v1006, 0.0
  %v1039 = vmax.f32 %v1007, 0.0
  %v1040 = vmax.f32 %v1008, 0.0
  %v1041 = vmax.f32 %v1009, 0.0
  %v1042 = vmax.f32 %v1010, 0.0
  %v1043 = vmax.f32 %v1011, 0.0
  %v1044 = vmax.f32 %v1012, 0.0
  %v1045 = vmax.f32 %v1013, 0.0
  %v1046 = vmax.f32 %v1014, 0.0
  %v1047 = vmax.f32 %v1015, 0.0
  %v1048 = vmax.f32 %v1016, 0.0
  %v1049 = vmax.f32 %v1017, 0.0
  %v1050 = vmax.f32 %v1018, 0.0
  %v1051 = vmax.f32 %v1019, 0.0
  %v1052 = vmax.f32 %v1020, 0.0
  %v1053 = vmax.f32 %v1021, 0.0
  %v1054 = vmax.f32 %v1022, 0.0
  %v1055 = vmax.f32 %v1023, 0.0
  %v1056 = vmax.f32 %v1024, 0.0
  %v1057 = vmax.f32 %v1025, 0.0
  %v1058 = vmax.f32 %v1026, 0.0
  %v1059 = vmax.f32 %v1027, 0.0
  %v1060 = vmax.f32 %v1028, 0.0
  %v1061 = vmax.f32 %v1029, 0.0
  %v1062 = vmax.f32 %v1030, 0.0
  %v1063 = vmax.f32 %v1031, 0.0
  %v1064 = vmax.f32 %v1032, 0.0
  %v1065 = vmax.f32 %v1033, 0.0
  %v1066 = vpack.c.bf16 %v1035, %v1034
  %v1067 = vpack.c.bf16 %v1037, %v1036
  %v1068 = vpack.c.bf16 %v1039, %v1038
  %v1069 = vpack.c.bf16 %v1041, %v1040
  %v1070 = vpack.c.bf16 %v1043, %v1042
  %v1071 = vpack.c.bf16 %v1045, %v1044
  %v1072 = vpack.c.bf16 %v1047, %v1046
  %v1073 = vpack.c.bf16 %v1049, %v1048
  %v1074 = vpack.c.bf16 %v1051, %v1050
  %v1075 = vpack.c.bf16 %v1053, %v1052
  %v1076 = vpack.c.bf16 %v1055, %v1054
  %v1077 = vpack.c.bf16 %v1057, %v1056
  %v1078 = vpack.c.bf16 %v1059, %v1058
  %v1079 = vpack.c.bf16 %v1061, %v1060
  %v1080 = vpack.c.bf16 %v1063, %v1062
  %v1081 = vpack.c.bf16 %v1065, %v1064
  %v1082 = vld [vmem:[%s7] sm:$0xf]
  %v1083 = vld [vmem:[%s7 + $0x4] sm:$0xf]
  %v1084 = vld [vmem:[%s7 + $0x8] sm:$0xf]
  %v1085 = vld [vmem:[%s7 + $0xc] sm:$0xf]
  %v1086 = vld [vmem:[%s7 + $0x10] sm:$0xf]
  %v1087 = vld [vmem:[%s7 + $0x14] sm:$0xf]
  %v1088 = vld [vmem:[%s7 + $0x18] sm:$0xf]
  %v1089 = vld [vmem:[%s7 + $0x1c] sm:$0xf]
  %v1090 = vld [vmem:[%s7 + $0x20] sm:$0xf]
  %v1091 = vld [vmem:[%s7 + $0x24] sm:$0xf]
  %v1092 = vld [vmem:[%s7 + $0x28] sm:$0xf]
  %v1093 = vld [vmem:[%s7 + $0x2c] sm:$0xf]
  %v1094 = vld [vmem:[%s7 + $0x30] sm:$0xf]
  %v1095 = vld [vmem:[%s7 + $0x34] sm:$0xf]
  %v1096 = vld [vmem:[%s7 + $0x38] sm:$0xf]
  %v1097 = vld [vmem:[%s7 + $0x3c] sm:$0xf]
  %v1098 = vld [vmem:[%s8] sm:$0x1]
  %v1100 = vlaneseq
  %v1101 = vshrl.u32 %v1100, 7
  %v1102 = vsub.s32 0, %v1101
  %v1103 = vrot.slane %v1098, %v1102
  %v1121 = vunpack.c.l.b16 %v1082
  %v1122 = vunpack.c.l.b16 %v1083
  %v1123 = vunpack.c.l.b16 %v1084
  %v1124 = vunpack.c.l.b16 %v1085
  %v1125 = vunpack.c.l.b16 %v1086
  %v1126 = vunpack.c.l.b16 %v1087
  %v1127 = vunpack.c.l.b16 %v1088
  %v1128 = vunpack.c.l.b16 %v1089
  %v1129 = vunpack.c.l.b16 %v1090
  %v1130 = vunpack.c.l.b16 %v1091
  %v1131 = vunpack.c.l.b16 %v1092
  %v1132 = vunpack.c.l.b16 %v1093
  %v1133 = vunpack.c.l.b16 %v1094
  %v1134 = vunpack.c.l.b16 %v1095
  %v1135 = vunpack.c.l.b16 %v1096
  %v1136 = vunpack.c.l.b16 %v1097
  %v1137 = vpack.c.b16 %v1122, %v1121
  %v1138 = vpack.c.b16 %v1124, %v1123
  %v1139 = vpack.c.b16 %v1126, %v1125
  %v1140 = vpack.c.b16 %v1128, %v1127
  %v1141 = vpack.c.b16 %v1130, %v1129
  %v1142 = vpack.c.b16 %v1132, %v1131
  %v1143 = vpack.c.b16 %v1134, %v1133
  %v1144 = vpack.c.b16 %v1136, %v1135
  %1153 = vmatprep.subr.bf16.mxu0 0
  %1154 = vmatpush1.bf16.msra.mxu0 %v1144
  %1155 = vmatprep.subr.bf16.mxu0 0
  %1156 = vmatpush1.bf16.msra.mxu0 %v1143
  %1157 = vmatprep.subr.bf16.mxu0 0
  %1158 = vmatpush1.bf16.msra.mxu0 %v1142
  %1159 = vmatprep.subr.bf16.mxu0 0
  %1160 = vmatpush1.bf16.msra.mxu0 %v1141
  %1161 = vmatprep.subr.bf16.mxu0 0
  %1162 = vmatpush1.bf16.msra.mxu0 %v1140
  %1163 = vmatprep.subr.bf16.mxu0 0
  %1164 = vmatpush1.bf16.msra.mxu0 %v1139
  %1165 = vmatprep.subr.bf16.mxu0 0
  %1166 = vmatpush1.bf16.msra.mxu0 %v1138
  %1167 = vmatprep.subr.bf16.mxu0 0
  %1168 = vmatpush1.bf16.msra.mxu0 %v1137
  %1169 = vmatprep.subr.bf16.mxu0 0
  %1170 = vmatpush2.bf16.msra.mxu0 0
  %1171 = vmatprep.subr.bf16.mxu0 0
  %1172 = vmatpush2.bf16.msra.mxu0 0
  %1173 = vmatprep.subr.bf16.mxu0 0
  %1174 = vmatpush2.bf16.msra.mxu0 0
  %1175 = vmatprep.subr.bf16.mxu0 0
  %1176 = vmatpush2.bf16.msra.mxu0 0
  %1177 = vmatprep.subr.bf16.mxu0 0
  %1178 = vmatpush2.bf16.msra.mxu0 0
  %1179 = vmatprep.subr.bf16.mxu0 0
  %1180 = vmatpush2.bf16.msra.mxu0 0
  %1181 = vmatprep.subr.bf16.mxu0 0
  %1182 = vmatpush2.bf16.msra.mxu0 0
  %1183 = vmatprep.subr.bf16.mxu0 0
  %1184 = vmatpush2.bf16.msra.mxu0 0
  %1185 = vmatprep.mubr.bf16.mxu0 0
  %1186 = vmatmul.mubr.bf16.gmra.mxu0 %v1066
  %v1187 = vpop.f32.mrf.mxu0
  %v1188 = vadd.f32 %v1103, %v1187
  %v1189 = vpop.f32.mrf.mxu0
  %v1190 = vpop.f32.mrf.mxu0
  %v1191 = vadd.f32 %v1103, %v1190
  %v1192 = vpop.f32.mrf.mxu0
  %1193 = vmatprep.mubr.bf16.mxu0 0
  %1194 = vmatmul.mubr.bf16.gmra.mxu0 %v1067
  %v1195 = vpop.f32.mrf.mxu0
  %v1196 = vadd.f32 %v1103, %v1195
  %v1197 = vpop.f32.mrf.mxu0
  %v1198 = vpop.f32.mrf.mxu0
  %v1199 = vadd.f32 %v1103, %v1198
  %v1200 = vpop.f32.mrf.mxu0
  %1201 = vmatprep.mubr.bf16.mxu0 0
  %1202 = vmatmul.mubr.bf16.gmra.mxu0 %v1068
  %v1203 = vpop.f32.mrf.mxu0
  %v1204 = vadd.f32 %v1103, %v1203
  %v1205 = vpop.f32.mrf.mxu0
  %v1206 = vpop.f32.mrf.mxu0
  %v1207 = vadd.f32 %v1103, %v1206
  %v1208 = vpop.f32.mrf.mxu0
  %1209 = vmatprep.mubr.bf16.mxu0 0
  %1210 = vmatmul.mubr.bf16.gmra.mxu0 %v1069
  %v1211 = vpop.f32.mrf.mxu0
  %v1212 = vadd.f32 %v1103, %v1211
  %v1213 = vpop.f32.mrf.mxu0
  %v1214 = vpop.f32.mrf.mxu0
  %v1215 = vadd.f32 %v1103, %v1214
  %v1216 = vpop.f32.mrf.mxu0
  %1217 = vmatprep.mubr.bf16.mxu0 0
  %1218 = vmatmul.mubr.bf16.gmra.mxu0 %v1070
  %v1219 = vpop.f32.mrf.mxu0
  %v1220 = vadd.f32 %v1103, %v1219
  %v1221 = vpop.f32.mrf.mxu0
  %v1222 = vpop.f32.mrf.mxu0
  %v1223 = vadd.f32 %v1103, %v1222
  %v1224 = vpop.f32.mrf.mxu0
  %1225 = vmatprep.mubr.bf16.mxu0 0
  %1226 = vmatmul.mubr.bf16.gmra.mxu0 %v1071
  %v1227 = vpop.f32.mrf.mxu0
  %v1228 = vadd.f32 %v1103, %v1227
  %v1229 = vpop.f32.mrf.mxu0
  %v1230 = vpop.f32.mrf.mxu0
  %v1231 = vadd.f32 %v1103, %v1230
  %v1232 = vpop.f32.mrf.mxu0
  %1233 = vmatprep.mubr.bf16.mxu0 0
  %1234 = vmatmul.mubr.bf16.gmra.mxu0 %v1072
  %v1235 = vpop.f32.mrf.mxu0
  %v1236 = vadd.f32 %v1103, %v1235
  %v1237 = vpop.f32.mrf.mxu0
  %v1238 = vpop.f32.mrf.mxu0
  %v1239 = vadd.f32 %v1103, %v1238
  %v1240 = vpop.f32.mrf.mxu0
  %1241 = vmatprep.mubr.bf16.mxu0 0
  %1242 = vmatmul.mubr.bf16.gmra.mxu0 %v1073
  %v1243 = vpop.f32.mrf.mxu0
  %v1244 = vadd.f32 %v1103, %v1243
  %v1245 = vpop.f32.mrf.mxu0
  %v1246 = vpop.f32.mrf.mxu0
  %v1247 = vadd.f32 %v1103, %v1246
  %v1248 = vpop.f32.mrf.mxu0
  %1249 = vmatprep.mubr.bf16.mxu0 0
  %1250 = vmatmul.mubr.bf16.gmra.mxu0 %v1074
  %v1251 = vpop.f32.mrf.mxu0
  %v1252 = vadd.f32 %v1103, %v1251
  %v1253 = vpop.f32.mrf.mxu0
  %v1254 = vpop.f32.mrf.mxu0
  %v1255 = vadd.f32 %v1103, %v1254
  %v1256 = vpop.f32.mrf.mxu0
  %1257 = vmatprep.mubr.bf16.mxu0 0
  %1258 = vmatmul.mubr.bf16.gmra.mxu0 %v1075
  %v1259 = vpop.f32.mrf.mxu0
  %v1260 = vadd.f32 %v1103, %v1259
  %v1261 = vpop.f32.mrf.mxu0
  %v1262 = vpop.f32.mrf.mxu0
  %v1263 = vadd.f32 %v1103, %v1262
  %v1264 = vpop.f32.mrf.mxu0
  %1265 = vmatprep.mubr.bf16.mxu0 0
  %1266 = vmatmul.mubr.bf16.gmra.mxu0 %v1076
  %v1267 = vpop.f32.mrf.mxu0
  %v1268 = vadd.f32 %v1103, %v1267
  %v1269 = vpop.f32.mrf.mxu0
  %v1270 = vpop.f32.mrf.mxu0
  %v1271 = vadd.f32 %v1103, %v1270
  %v1272 = vpop.f32.mrf.mxu0
  %1273 = vmatprep.mubr.bf16.mxu0 0
  %1274 = vmatmul.mubr.bf16.gmra.mxu0 %v1077
  %v1275 = vpop.f32.mrf.mxu0
  %v1276 = vadd.f32 %v1103, %v1275
  %v1277 = vpop.f32.mrf.mxu0
  %v1278 = vpop.f32.mrf.mxu0
  %v1279 = vadd.f32 %v1103, %v1278
  %v1280 = vpop.f32.mrf.mxu0
  %1281 = vmatprep.mubr.bf16.mxu0 0
  %1282 = vmatmul.mubr.bf16.gmra.mxu0 %v1078
  %v1283 = vpop.f32.mrf.mxu0
  %v1284 = vadd.f32 %v1103, %v1283
  %v1285 = vpop.f32.mrf.mxu0
  %v1286 = vpop.f32.mrf.mxu0
  %v1287 = vadd.f32 %v1103, %v1286
  %v1288 = vpop.f32.mrf.mxu0
  %1289 = vmatprep.mubr.bf16.mxu0 0
  %1290 = vmatmul.mubr.bf16.gmra.mxu0 %v1079
  %v1291 = vpop.f32.mrf.mxu0
  %v1292 = vadd.f32 %v1103, %v1291
  %v1293 = vpop.f32.mrf.mxu0
  %v1294 = vpop.f32.mrf.mxu0
  %v1295 = vadd.f32 %v1103, %v1294
  %v1296 = vpop.f32.mrf.mxu0
  %1297 = vmatprep.mubr.bf16.mxu0 0
  %1298 = vmatmul.mubr.bf16.gmra.mxu0 %v1080
  %v1299 = vpop.f32.mrf.mxu0
  %v1300 = vadd.f32 %v1103, %v1299
  %v1301 = vpop.f32.mrf.mxu0
  %v1302 = vpop.f32.mrf.mxu0
  %v1303 = vadd.f32 %v1103, %v1302
  %v1304 = vpop.f32.mrf.mxu0
  %1305 = vmatprep.mubr.bf16.mxu0 0
  %1306 = vmatmul.mubr.bf16.gmra.mxu0 %v1081
  %v1307 = vpop.f32.mrf.mxu0
  %v1308 = vadd.f32 %v1103, %v1307
  %v1309 = vpop.f32.mrf.mxu0
  %v1310 = vpop.f32.mrf.mxu0
  %v1311 = vadd.f32 %v1103, %v1310
  %v1312 = vpop.f32.mrf.mxu0
  %1313 = vdwg.mxu0
  %v1314 = vmax.f32 %v1188, 0.0
  %v1315 = vmax.f32 %v1191, 0.0
  %v1316 = vmax.f32 %v1196, 0.0
  %v1317 = vmax.f32 %v1199, 0.0
  %v1318 = vmax.f32 %v1204, 0.0
  %v1319 = vmax.f32 %v1207, 0.0
  %v1320 = vmax.f32 %v1212, 0.0
  %v1321 = vmax.f32 %v1215, 0.0
  %v1322 = vmax.f32 %v1220, 0.0
  %v1323 = vmax.f32 %v1223, 0.0
  %v1324 = vmax.f32 %v1228, 0.0
  %v1325 = vmax.f32 %v1231, 0.0
  %v1326 = vmax.f32 %v1236, 0.0
  %v1327 = vmax.f32 %v1239, 0.0
  %v1328 = vmax.f32 %v1244, 0.0
  %v1329 = vmax.f32 %v1247, 0.0
  %v1330 = vmax.f32 %v1252, 0.0
  %v1331 = vmax.f32 %v1255, 0.0
  %v1332 = vmax.f32 %v1260, 0.0
  %v1333 = vmax.f32 %v1263, 0.0
  %v1334 = vmax.f32 %v1268, 0.0
  %v1335 = vmax.f32 %v1271, 0.0
  %v1336 = vmax.f32 %v1276, 0.0
  %v1337 = vmax.f32 %v1279, 0.0
  %v1338 = vmax.f32 %v1284, 0.0
  %v1339 = vmax.f32 %v1287, 0.0
  %v1340 = vmax.f32 %v1292, 0.0
  %v1341 = vmax.f32 %v1295, 0.0
  %v1342 = vmax.f32 %v1300, 0.0
  %v1343 = vmax.f32 %v1303, 0.0
  %v1344 = vmax.f32 %v1308, 0.0
  %v1345 = vmax.f32 %v1311, 0.0
  %v1346 = vpack.c.bf16 %v1315, %v1314
  %v1347 = vpack.c.bf16 %v1317, %v1316
  %v1348 = vpack.c.bf16 %v1319, %v1318
  %v1349 = vpack.c.bf16 %v1321, %v1320
  %v1350 = vpack.c.bf16 %v1323, %v1322
  %v1351 = vpack.c.bf16 %v1325, %v1324
  %v1352 = vpack.c.bf16 %v1327, %v1326
  %v1353 = vpack.c.bf16 %v1329, %v1328
  %v1354 = vpack.c.bf16 %v1331, %v1330
  %v1355 = vpack.c.bf16 %v1333, %v1332
  %v1356 = vpack.c.bf16 %v1335, %v1334
  %v1357 = vpack.c.bf16 %v1337, %v1336
  %v1358 = vpack.c.bf16 %v1339, %v1338
  %v1359 = vpack.c.bf16 %v1341, %v1340
  %v1360 = vpack.c.bf16 %v1343, %v1342
  %v1361 = vpack.c.bf16 %v1345, %v1344
  %v1362 = vld [vmem:[%s9] sm:$0xf]
  %v1363 = vld [vmem:[%s9 + $0x4] sm:$0xf]
  %v1364 = vld [vmem:[%s9 + $0x8] sm:$0xf]
  %v1365 = vld [vmem:[%s9 + $0xc] sm:$0xf]
  %v1366 = vld [vmem:[%s9 + $0x10] sm:$0xf]
  %v1367 = vld [vmem:[%s9 + $0x14] sm:$0xf]
  %v1368 = vld [vmem:[%s9 + $0x18] sm:$0xf]
  %v1369 = vld [vmem:[%s9 + $0x1c] sm:$0xf]
  %v1370 = vld [vmem:[%s9 + $0x20] sm:$0xf]
  %v1371 = vld [vmem:[%s9 + $0x24] sm:$0xf]
  %v1372 = vld [vmem:[%s9 + $0x28] sm:$0xf]
  %v1373 = vld [vmem:[%s9 + $0x2c] sm:$0xf]
  %v1374 = vld [vmem:[%s9 + $0x30] sm:$0xf]
  %v1375 = vld [vmem:[%s9 + $0x34] sm:$0xf]
  %v1376 = vld [vmem:[%s9 + $0x38] sm:$0xf]
  %v1377 = vld [vmem:[%s9 + $0x3c] sm:$0xf]
  %v1378 = vld [vmem:[#allocation2] sm:$0x1]
  %v1380 = vlaneseq
  %v1381 = vshrl.u32 %v1380, 7
  %v1382 = vsub.s32 0, %v1381
  %v1383 = vrot.slane %v1378, %v1382
  %v1401 = vunpack.c.l.b16 %v1362
  %v1402 = vunpack.c.l.b16 %v1363
  %v1403 = vunpack.c.l.b16 %v1364
  %v1404 = vunpack.c.l.b16 %v1365
  %v1405 = vunpack.c.l.b16 %v1366
  %v1406 = vunpack.c.l.b16 %v1367
  %v1407 = vunpack.c.l.b16 %v1368
  %v1408 = vunpack.c.l.b16 %v1369
  %v1409 = vunpack.c.l.b16 %v1370
  %v1410 = vunpack.c.l.b16 %v1371
  %v1411 = vunpack.c.l.b16 %v1372
  %v1412 = vunpack.c.l.b16 %v1373
  %v1413 = vunpack.c.l.b16 %v1374
  %v1414 = vunpack.c.l.b16 %v1375
  %v1415 = vunpack.c.l.b16 %v1376
  %v1416 = vunpack.c.l.b16 %v1377
  %v1417 = vpack.c.b16 %v1402, %v1401
  %v1418 = vpack.c.b16 %v1404, %v1403
  %v1419 = vpack.c.b16 %v1406, %v1405
  %v1420 = vpack.c.b16 %v1408, %v1407
  %v1421 = vpack.c.b16 %v1410, %v1409
  %v1422 = vpack.c.b16 %v1412, %v1411
  %v1423 = vpack.c.b16 %v1414, %v1413
  %v1424 = vpack.c.b16 %v1416, %v1415
  %1433 = vmatprep.subr.bf16.mxu0 0
  %1434 = vmatpush1.bf16.msra.mxu0 %v1424
  %1435 = vmatprep.subr.bf16.mxu0 0
  %1436 = vmatpush1.bf16.msra.mxu0 %v1423
  %1437 = vmatprep.subr.bf16.mxu0 0
  %1438 = vmatpush1.bf16.msra.mxu0 %v1422
  %1439 = vmatprep.subr.bf16.mxu0 0
  %1440 = vmatpush1.bf16.msra.mxu0 %v1421
  %1441 = vmatprep.subr.bf16.mxu0 0
  %1442 = vmatpush1.bf16.msra.mxu0 %v1420
  %1443 = vmatprep.subr.bf16.mxu0 0
  %1444 = vmatpush1.bf16.msra.mxu0 %v1419
  %1445 = vmatprep.subr.bf16.mxu0 0
  %1446 = vmatpush1.bf16.msra.mxu0 %v1418
  %1447 = vmatprep.subr.bf16.mxu0 0
  %1448 = vmatpush1.bf16.msra.mxu0 %v1417
  %1449 = vmatprep.subr.bf16.mxu0 0
  %1450 = vmatpush2.bf16.msra.mxu0 0
  %1451 = vmatprep.subr.bf16.mxu0 0
  %1452 = vmatpush2.bf16.msra.mxu0 0
  %1453 = vmatprep.subr.bf16.mxu0 0
  %1454 = vmatpush2.bf16.msra.mxu0 0
  %1455 = vmatprep.subr.bf16.mxu0 0
  %1456 = vmatpush2.bf16.msra.mxu0 0
  %1457 = vmatprep.subr.bf16.mxu0 0
  %1458 = vmatpush2.bf16.msra.mxu0 0
  %1459 = vmatprep.subr.bf16.mxu0 0
  %1460 = vmatpush2.bf16.msra.mxu0 0
  %1461 = vmatprep.subr.bf16.mxu0 0
  %1462 = vmatpush2.bf16.msra.mxu0 0
  %1463 = vmatprep.subr.bf16.mxu0 0
  %1464 = vmatpush2.bf16.msra.mxu0 0
  %1465 = vmatprep.mubr.bf16.mxu0 0
  %1466 = vmatmul.mubr.bf16.gmra.mxu0 %v1346
  %v1467 = vpop.f32.mrf.mxu0
  %v1468 = vadd.f32 %v1383, %v1467
  %v1469 = vpop.f32.mrf.mxu0
  %v1470 = vpop.f32.mrf.mxu0
  %v1471 = vadd.f32 %v1383, %v1470
  %v1472 = vpop.f32.mrf.mxu0
  %1473 = vmatprep.mubr.bf16.mxu0 0
  %1474 = vmatmul.mubr.bf16.gmra.mxu0 %v1347
  %v1475 = vpop.f32.mrf.mxu0
  %v1476 = vadd.f32 %v1383, %v1475
  %v1477 = vpop.f32.mrf.mxu0
  %v1478 = vpop.f32.mrf.mxu0
  %v1479 = vadd.f32 %v1383, %v1478
  %v1480 = vpop.f32.mrf.mxu0
  %1481 = vmatprep.mubr.bf16.mxu0 0
  %1482 = vmatmul.mubr.bf16.gmra.mxu0 %v1348
  %v1483 = vpop.f32.mrf.mxu0
  %v1484 = vadd.f32 %v1383, %v1483
  %v1485 = vpop.f32.mrf.mxu0
  %v1486 = vpop.f32.mrf.mxu0
  %v1487 = vadd.f32 %v1383, %v1486
  %v1488 = vpop.f32.mrf.mxu0
  %1489 = vmatprep.mubr.bf16.mxu0 0
  %1490 = vmatmul.mubr.bf16.gmra.mxu0 %v1349
  %v1491 = vpop.f32.mrf.mxu0
  %v1492 = vadd.f32 %v1383, %v1491
  %v1493 = vpop.f32.mrf.mxu0
  %v1494 = vpop.f32.mrf.mxu0
  %v1495 = vadd.f32 %v1383, %v1494
  %v1496 = vpop.f32.mrf.mxu0
  %1497 = vmatprep.mubr.bf16.mxu0 0
  %1498 = vmatmul.mubr.bf16.gmra.mxu0 %v1350
  %v1499 = vpop.f32.mrf.mxu0
  %v1500 = vadd.f32 %v1383, %v1499
  %v1501 = vpop.f32.mrf.mxu0
  %v1502 = vpop.f32.mrf.mxu0
  %v1503 = vadd.f32 %v1383, %v1502
  %v1504 = vpop.f32.mrf.mxu0
  %1505 = vmatprep.mubr.bf16.mxu0 0
  %1506 = vmatmul.mubr.bf16.gmra.mxu0 %v1351
  %v1507 = vpop.f32.mrf.mxu0
  %v1508 = vadd.f32 %v1383, %v1507
  %v1509 = vpop.f32.mrf.mxu0
  %v1510 = vpop.f32.mrf.mxu0
  %v1511 = vadd.f32 %v1383, %v1510
  %v1512 = vpop.f32.mrf.mxu0
  %1513 = vmatprep.mubr.bf16.mxu0 0
  %1514 = vmatmul.mubr.bf16.gmra.mxu0 %v1352
  %v1515 = vpop.f32.mrf.mxu0
  %v1516 = vadd.f32 %v1383, %v1515
  %v1517 = vpop.f32.mrf.mxu0
  %v1518 = vpop.f32.mrf.mxu0
  %v1519 = vadd.f32 %v1383, %v1518
  %v1520 = vpop.f32.mrf.mxu0
  %1521 = vmatprep.mubr.bf16.mxu0 0
  %1522 = vmatmul.mubr.bf16.gmra.mxu0 %v1353
  %v1523 = vpop.f32.mrf.mxu0
  %v1524 = vadd.f32 %v1383, %v1523
  %v1525 = vpop.f32.mrf.mxu0
  %v1526 = vpop.f32.mrf.mxu0
  %v1527 = vadd.f32 %v1383, %v1526
  %v1528 = vpop.f32.mrf.mxu0
  %1529 = vmatprep.mubr.bf16.mxu0 0
  %1530 = vmatmul.mubr.bf16.gmra.mxu0 %v1354
  %v1531 = vpop.f32.mrf.mxu0
  %v1532 = vadd.f32 %v1383, %v1531
  %v1533 = vpop.f32.mrf.mxu0
  %v1534 = vpop.f32.mrf.mxu0
  %v1535 = vadd.f32 %v1383, %v1534
  %v1536 = vpop.f32.mrf.mxu0
  %1537 = vmatprep.mubr.bf16.mxu0 0
  %1538 = vmatmul.mubr.bf16.gmra.mxu0 %v1355
  %v1539 = vpop.f32.mrf.mxu0
  %v1540 = vadd.f32 %v1383, %v1539
  %v1541 = vpop.f32.mrf.mxu0
  %v1542 = vpop.f32.mrf.mxu0
  %v1543 = vadd.f32 %v1383, %v1542
  %v1544 = vpop.f32.mrf.mxu0
  %1545 = vmatprep.mubr.bf16.mxu0 0
  %1546 = vmatmul.mubr.bf16.gmra.mxu0 %v1356
  %v1547 = vpop.f32.mrf.mxu0
  %v1548 = vadd.f32 %v1383, %v1547
  %v1549 = vpop.f32.mrf.mxu0
  %v1550 = vpop.f32.mrf.mxu0
  %v1551 = vadd.f32 %v1383, %v1550
  %v1552 = vpop.f32.mrf.mxu0
  %1553 = vmatprep.mubr.bf16.mxu0 0
  %1554 = vmatmul.mubr.bf16.gmra.mxu0 %v1357
  %v1555 = vpop.f32.mrf.mxu0
  %v1556 = vadd.f32 %v1383, %v1555
  %v1557 = vpop.f32.mrf.mxu0
  %v1558 = vpop.f32.mrf.mxu0
  %v1559 = vadd.f32 %v1383, %v1558
  %v1560 = vpop.f32.mrf.mxu0
  %1561 = vmatprep.mubr.bf16.mxu0 0
  %1562 = vmatmul.mubr.bf16.gmra.mxu0 %v1358
  %v1563 = vpop.f32.mrf.mxu0
  %v1564 = vadd.f32 %v1383, %v1563
  %v1565 = vpop.f32.mrf.mxu0
  %v1566 = vpop.f32.mrf.mxu0
  %v1567 = vadd.f32 %v1383, %v1566
  %v1568 = vpop.f32.mrf.mxu0
  %1569 = vmatprep.mubr.bf16.mxu0 0
  %1570 = vmatmul.mubr.bf16.gmra.mxu0 %v1359
  %v1571 = vpop.f32.mrf.mxu0
  %v1572 = vadd.f32 %v1383, %v1571
  %v1573 = vpop.f32.mrf.mxu0
  %v1574 = vpop.f32.mrf.mxu0
  %v1575 = vadd.f32 %v1383, %v1574
  %v1576 = vpop.f32.mrf.mxu0
  %1577 = vmatprep.mubr.bf16.mxu0 0
  %1578 = vmatmul.mubr.bf16.gmra.mxu0 %v1360
  %v1579 = vpop.f32.mrf.mxu0
  %v1580 = vadd.f32 %v1383, %v1579
  %v1581 = vpop.f32.mrf.mxu0
  %v1582 = vpop.f32.mrf.mxu0
  %v1583 = vadd.f32 %v1383, %v1582
  %v1584 = vpop.f32.mrf.mxu0
  %1585 = vmatprep.mubr.bf16.mxu0 0
  %1586 = vmatmul.mubr.bf16.gmra.mxu0 %v1361
  %v1587 = vpop.f32.mrf.mxu0
  %v1588 = vadd.f32 %v1383, %v1587
  %v1589 = vpop.f32.mrf.mxu0
  %v1590 = vpop.f32.mrf.mxu0
  %v1591 = vadd.f32 %v1383, %v1590
  %v1592 = vpop.f32.mrf.mxu0
  %1593 = vdwg.mxu0
  %vm1594 = vcmask 7168
  %1595 = vst.msk [vmem:[%s11] sm:$0xff] %vm1594, %v1468
  %1596 = vst.msk [vmem:[%s11 + $0x8] sm:$0xff] %vm1594, %v1471
  %1597 = vst.msk [vmem:[%s11 + $0x10] sm:$0xff] %vm1594, %v1476
  %1598 = vst.msk [vmem:[%s11 + $0x18] sm:$0xff] %vm1594, %v1479
  %1599 = vst.msk [vmem:[%s11 + $0x20] sm:$0xff] %vm1594, %v1484
  %1600 = vst.msk [vmem:[%s11 + $0x28] sm:$0xff] %vm1594, %v1487
  %1601 = vst.msk [vmem:[%s11 + $0x30] sm:$0xff] %vm1594, %v1492
  %1602 = vst.msk [vmem:[%s11 + $0x38] sm:$0xff] %vm1594, %v1495
  %1603 = vst.msk [vmem:[%s11 + $0x40] sm:$0xff] %vm1594, %v1500
  %1604 = vst.msk [vmem:[%s11 + $0x48] sm:$0xff] %vm1594, %v1503
  %1605 = vst.msk [vmem:[%s11 + $0x50] sm:$0xff] %vm1594, %v1508
  %1606 = vst.msk [vmem:[%s11 + $0x58] sm:$0xff] %vm1594, %v1511
  %1607 = vst.msk [vmem:[%s11 + $0x60] sm:$0xff] %vm1594, %v1516
  %1608 = vst.msk [vmem:[%s11 + $0x68] sm:$0xff] %vm1594, %v1519
  %1609 = vst.msk [vmem:[%s11 + $0x70] sm:$0xff] %vm1594, %v1524
  %1610 = vst.msk [vmem:[%s11 + $0x78] sm:$0xff] %vm1594, %v1527
  %1611 = vst.msk [vmem:[%s11 + $0x80] sm:$0xff] %vm1594, %v1532
  %1612 = vst.msk [vmem:[%s11 + $0x88] sm:$0xff] %vm1594, %v1535
  %1613 = vst.msk [vmem:[%s11 + $0x90] sm:$0xff] %vm1594, %v1540
  %1614 = vst.msk [vmem:[%s11 + $0x98] sm:$0xff] %vm1594, %v1543
  %1615 = vst.msk [vmem:[%s11 + $0xa0] sm:$0xff] %vm1594, %v1548
  %1616 = vst.msk [vmem:[%s11 + $0xa8] sm:$0xff] %vm1594, %v1551
  %1617 = vst.msk [vmem:[%s11 + $0xb0] sm:$0xff] %vm1594, %v1556
  %1618 = vst.msk [vmem:[%s11 + $0xb8] sm:$0xff] %vm1594, %v1559
  %1619 = vst.msk [vmem:[%s11 + $0xc0] sm:$0xff] %vm1594, %v1564
  %1620 = vst.msk [vmem:[%s11 + $0xc8] sm:$0xff] %vm1594, %v1567
  %1621 = vst.msk [vmem:[%s11 + $0xd0] sm:$0xff] %vm1594, %v1572
  %1622 = vst.msk [vmem:[%s11 + $0xd8] sm:$0xff] %vm1594, %v1575
  %1623 = vst.msk [vmem:[%s11 + $0xe0] sm:$0xff] %vm1594, %v1580
  %1624 = vst.msk [vmem:[%s11 + $0xe8] sm:$0xff] %vm1594, %v1583
  %1625 = vst.msk [vmem:[%s11 + $0xf0] sm:$0xff] %vm1594, %v1588
  %1626 = vst.msk [vmem:[%s11 + $0xf8] sm:$0xff] %vm1594, %v1591
  // Predicated region
  $region46: #{_reward_forward_impl.1} parent=0 // pred_check
    _
  $region47: #{_reward_forward_impl.1} parent=0 // pred_check_branch
    %1628 = sbr.rel (0) target = $region49
  $region48: #{_reward_forward_impl.1} parent=0 // pred_region
    _
  $region49: #{_reward_forward_impl.1} parent=0 // pred_fallthru
    _
  // Predicated region
  $region50: #{_reward_forward_impl.1} parent=0 // pred_check
    _
  $region51: #{_reward_forward_impl.1} parent=0 // pred_check_branch
    %1630 = sbr.rel (0) target = $region53
  $region52: #{_reward_forward_impl.1} parent=0 // pred_region
    _
  $region53: #{_reward_forward_impl.1} parent=0 // pred_fallthru
    _

</llo_original>
